<compile_context>
chip_gen: v7x
topology: tpu7x:2x2x1
jax: 0.10.0
libtpu: 0.0.40
codegen_flags: <defaults>
</compile_context>

<pallas_src>
import functools
import math

import jax
import jax.numpy as jnp
from jax import lax
from jax.experimental import pallas as pl
from jax.experimental.pallas import tpu as pltpu

EPS = 1e-6
MAX_TILE_M = 256                       # rows of B*S per grid step
VMEM_LIMIT = 32 * 1024 * 1024          # explicit; fits every generation


def _tile_m(M):
    return M if M <= MAX_TILE_M else MAX_TILE_M


def _compiler_params(n_axes=1):
    return pltpu.CompilerParams(
        dimension_semantics=("parallel",) * n_axes,
        vmem_limit_bytes=VMEM_LIMIT,
    )


# ----------------------------------------------------------------------------
# In-kernel LayerNorm helper (reference semantics: unbiased std, eps on var)
# ----------------------------------------------------------------------------
def _layernorm_f32(x, a, b):
    d = x.shape[-1]
    mean = jnp.mean(x, axis=-1, keepdims=True)
    xc = x - mean
    var_unbiased = jnp.sum(xc * xc, axis=-1, keepdims=True) / (d - 1)
    return a * (xc * lax.rsqrt(var_unbiased + EPS)) + b


# ----------------------------------------------------------------------------
# Kernel A: LayerNorm + fused QKV projection
# ----------------------------------------------------------------------------
def _ln_qkv_kernel(x_ref, a_ref, b_ref, w_ref, wb_ref, o_ref):
    x = x_ref[...].astype(jnp.float32)                          # (TM, D)
    xn = _layernorm_f32(x, a_ref[...], b_ref[...])
    y = jnp.dot(xn, w_ref[...], preferred_element_type=jnp.float32) + wb_ref[...]
    o_ref[...] = y.astype(o_ref.dtype)


def ln_qkv(x2d, ln_a, ln_b, w_qkv, b_qkv):
    M, D = x2d.shape
    N = w_qkv.shape[1]                                          # 3*D
    tm = _tile_m(M)
    return pl.pallas_call(
        _ln_qkv_kernel,
        out_shape=jax.ShapeDtypeStruct((M, N), x2d.dtype),
        grid=(pl.cdiv(M, tm),),
        in_specs=[
            pl.BlockSpec((tm, D), lambda i: (i, 0)),
            pl.BlockSpec((1, D), lambda i: (0, 0)),
            pl.BlockSpec((1, D), lambda i: (0, 0)),
            pl.BlockSpec((D, N), lambda i: (0, 0)),
            pl.BlockSpec((1, N), lambda i: (0, 0)),
        ],
        out_specs=pl.BlockSpec((tm, N), lambda i: (i, 0)),
        compiler_params=_compiler_params(),
    )(x2d, ln_a.reshape(1, D), ln_b.reshape(1, D), w_qkv, b_qkv.reshape(1, N))


# ----------------------------------------------------------------------------
# Kernel B: attention (all heads) + output projection + residual add
#   qkv: (B, S, 3, D) lane-dense; grid over batch only.
# ----------------------------------------------------------------------------
def _attn_proj_residual_kernel(qkv_ref, m_ref, wo_ref, bo_ref, xres_ref, o_ref,
                               *, n_heads, scale):
    D = qkv_ref.shape[3]
    dk = D // n_heads

    q = qkv_ref[0, :, 0, :].astype(jnp.float32)                 # (S, D)
    k = qkv_ref[0, :, 1, :].astype(jnp.float32)
    v = qkv_ref[0, :, 2, :].astype(jnp.float32)
    key_mask = m_ref[0]                                          # (1, S) key mask
    neg = jnp.float32(-1e9)

    # residual + output-projection bias; heads are accumulated into this.
    y = xres_ref[0].astype(jnp.float32) + bo_ref[...]            # (S, D)

    for h in range(n_heads):                                     # static unroll
        sl = slice(h * dk, (h + 1) * dk)
        qh, kh, vh = q[:, sl], k[:, sl], v[:, sl]                # (S, dk)
        # q @ k^T without an explicit transpose: contract the last axes.
        s = lax.dot_general(qh, kh, (((1,), (1,)), ((), ())),
                            preferred_element_type=jnp.float32) * scale
        s = jnp.where(key_mask == 0, neg, s)                     # masked_fill
        smax = jnp.max(s, axis=-1, keepdims=True)
        e = jnp.exp(s - smax)
        p = e * pl.reciprocal(jnp.sum(e, axis=-1, keepdims=True), approx=True)
        ctx = jnp.dot(p, vh, preferred_element_type=jnp.float32)  # (S, dk)
        # head-merge + Wo fused: y += ctx_h @ Wo[h*dk:(h+1)*dk, :]
        y = y + jnp.dot(ctx, wo_ref[sl, :], preferred_element_type=jnp.float32)

    o_ref[0] = y.astype(o_ref.dtype)                             # lane-dense (S, D)


def attention_block(qkv, mask, wo, bo, x_res, n_heads):
    B, S, _, D = qkv.shape
    scale = 1.0 / math.sqrt(D // n_heads)
    kern = functools.partial(_attn_proj_residual_kernel,
                             n_heads=n_heads, scale=scale)
    return pl.pallas_call(
        kern,
        out_shape=jax.ShapeDtypeStruct((B, S, D), x_res.dtype),
        grid=(B,),
        in_specs=[
            pl.BlockSpec((1, S, 3, D), lambda b: (b, 0, 0, 0)),
            pl.BlockSpec((1, 1, S), lambda b: (b, 0, 0)),
            pl.BlockSpec((D, D), lambda b: (0, 0)),
            pl.BlockSpec((1, D), lambda b: (0, 0)),
            pl.BlockSpec((1, S, D), lambda b: (b, 0, 0)),
        ],
        out_specs=pl.BlockSpec((1, S, D), lambda b: (b, 0, 0)),
        compiler_params=_compiler_params(),
    )(qkv, mask, wo, bo.reshape(1, D), x_res)


# ----------------------------------------------------------------------------
# Kernel C: LayerNorm + FFN (w1/ReLU/w2) + residual add
# ----------------------------------------------------------------------------
def _ln_ffn_residual_kernel(x_ref, a_ref, b_ref, w1_ref, b1_ref, w2_ref, b2_ref,
                            o_ref):
    x = x_ref[...].astype(jnp.float32)                           # (TM, D)
    xn = _layernorm_f32(x, a_ref[...], b_ref[...])
    h = jnp.dot(xn, w1_ref[...], preferred_element_type=jnp.float32) + b1_ref[...]
    h = jnp.maximum(h, 0.0)
    y = jnp.dot(h, w2_ref[...], preferred_element_type=jnp.float32) + b2_ref[...]
    o_ref[...] = (x + y).astype(o_ref.dtype)                     # residual fused


def ln_ffn_residual(x2d, ln_a, ln_b, w1, b1, w2, b2):
    M, D = x2d.shape
    DFF = w1.shape[1]
    tm = _tile_m(M)
    return pl.pallas_call(
        _ln_ffn_residual_kernel,
        out_shape=jax.ShapeDtypeStruct((M, D), x2d.dtype),
        grid=(pl.cdiv(M, tm),),
        in_specs=[
            pl.BlockSpec((tm, D), lambda i: (i, 0)),
            pl.BlockSpec((1, D), lambda i: (0, 0)),
            pl.BlockSpec((1, D), lambda i: (0, 0)),
            pl.BlockSpec((D, DFF), lambda i: (0, 0)),
            pl.BlockSpec((1, DFF), lambda i: (0, 0)),
            pl.BlockSpec((DFF, D), lambda i: (0, 0)),
            pl.BlockSpec((1, D), lambda i: (0, 0)),
        ],
        out_specs=pl.BlockSpec((tm, D), lambda i: (i, 0)),
        compiler_params=_compiler_params(),
    )(x2d, ln_a.reshape(1, D), ln_b.reshape(1, D),
      w1, b1.reshape(1, DFF), w2, b2.reshape(1, D))


# ----------------------------------------------------------------------------
# Kernel D: final LayerNorm (tiled over rows)
# ----------------------------------------------------------------------------
def _ln_kernel(x_ref, a_ref, b_ref, o_ref):
    x = x_ref[...].astype(jnp.float32)
    o_ref[...] = _layernorm_f32(x, a_ref[...], b_ref[...]).astype(o_ref.dtype)


def layernorm(x2d, a, b):
    M, D = x2d.shape
    tm = _tile_m(M)
    return pl.pallas_call(
        _ln_kernel,
        out_shape=jax.ShapeDtypeStruct((M, D), x2d.dtype),
        grid=(pl.cdiv(M, tm),),
        in_specs=[
            pl.BlockSpec((tm, D), lambda i: (i, 0)),
            pl.BlockSpec((1, D), lambda i: (0, 0)),
            pl.BlockSpec((1, D), lambda i: (0, 0)),
        ],
        out_specs=pl.BlockSpec((tm, D), lambda i: (i, 0)),
        compiler_params=_compiler_params(),
    )(x2d, a.reshape(1, D), b.reshape(1, D))


# ----------------------------------------------------------------------------
# Module-level forward (only reshapes / parameter plumbing in plain JAX)
# ----------------------------------------------------------------------------
def encoder_layer(x, mask, p, n_heads):
    B, S, D = x.shape
    M = B * S
    # SublayerConnection 1:  x + self_attn(norm(x))   (dropout == identity)
    qkv = ln_qkv(x.reshape(M, D), p["ln1_a"], p["ln1_b"], p["w_qkv"], p["b_qkv"])
    qkv = qkv.reshape(B, S, 3, D)               # free row-major split of 3D
    x = attention_block(qkv, mask, p["wo"], p["bo"], x, n_heads)
    # SublayerConnection 2:  x + ffn(norm(x))
    x = ln_ffn_residual(x.reshape(M, D), p["ln2_a"], p["ln2_b"],
                        p["w1"], p["b1"], p["w2"], p["b2"]).reshape(B, S, D)
    return x


def encoder_forward(x, mask, params, n_heads):
    for p in params["layers"]:
        x = encoder_layer(x, mask, p, n_heads)
    B, S, D = x.shape
    return layernorm(x.reshape(B * S, D),
                     params["norm_a"], params["norm_b"]).reshape(B, S, D)


# ----------------------------------------------------------------------------
# Deterministic synthetic parameters (q/k/v weights fused into one (D, 3D))
# ----------------------------------------------------------------------------
def init_params(key, n_layers, d_model, d_ff):
    def w(k, shape, scale=0.02):
        return (scale * jax.random.normal(k, shape)).astype(jnp.float32)

    layers = []
    for li in range(n_layers):
        keys = jax.random.split(jax.random.fold_in(key, li), 6)
        wq, wk, wv = (w(keys[i], (d_model, d_model)) for i in range(3))
        layers.append(dict(
            w_qkv=jnp.concatenate([wq, wk, wv], axis=1),          # (D, 3D)
            b_qkv=jnp.zeros((3 * d_model,), jnp.float32),
            wo=w(keys[3], (d_model, d_model)),
            bo=jnp.zeros((d_model,), jnp.float32),
            w1=w(keys[4], (d_model, d_ff)), b1=jnp.zeros((d_ff,), jnp.float32),
            w2=w(keys[5], (d_ff, d_model)), b2=jnp.zeros((d_model,), jnp.float32),
            ln1_a=jnp.ones((d_model,), jnp.float32),
            ln1_b=jnp.zeros((d_model,), jnp.float32),
            ln2_a=jnp.ones((d_model,), jnp.float32),
            ln2_b=jnp.zeros((d_model,), jnp.float32),
        ))
    return dict(
        layers=layers,
        norm_a=jnp.ones((d_model,), jnp.float32),
        norm_b=jnp.zeros((d_model,), jnp.float32),
    )


if __name__ == "__main__":
    B, S, D, H, DFF, NLAYERS = 2, 8, 32, 4, 64, 2
    key = jax.random.PRNGKey(0)
    kx, kp = jax.random.split(key)

    x = jax.random.normal(kx, (B, S, D), dtype=jnp.float32)
    mask = jnp.ones((B, 1, S), dtype=jnp.float32)     # all key positions valid
    params = init_params(kp, NLAYERS, D, DFF)

    fwd = jax.jit(functools.partial(encoder_forward, n_heads=H))
    out = jax.block_until_ready(fwd(x, mask, params))
    assert out.shape == (B, S, D) and out.dtype == jnp.float32
    assert bool(jnp.all(jnp.isfinite(out)))
    print("KERNEL_OK")
</pallas_src>

<mosaic_0001>
module attributes {stable_mosaic.version = 11 : i64} {
  func.func @_attn_proj_residual_kernel(%arg0: i32, %arg1: memref<1x8x3x32xf32, #tpu.memory_space<vmem>>, %arg2: memref<1x1x8xf32, #tpu.memory_space<vmem>>, %arg3: memref<32x32xf32, #tpu.memory_space<vmem>>, %arg4: memref<1x32xf32, #tpu.memory_space<vmem>>, %arg5: memref<1x8x32xf32, #tpu.memory_space<vmem>>, %arg6: memref<1x8x32xf32, #tpu.memory_space<vmem>>) attributes {dimension_semantics = [#tpu.dimension_semantics<parallel>], iteration_bounds = array<i64: 2>, scalar_prefetch = 0 : i64, scratch_operands = 0 : i64, tpu.core_type = #tpu.core_type<tc>, window_params = [{transform_indices = @transform_0, window_bounds = array<i64: 1, 8, 3, 32>}, {transform_indices = @transform_1, window_bounds = array<i64: 1, 1, 8>}, {pipeline_mode = #tpu.pipeline_mode<synchronous>, transform_indices = @transform_2, window_bounds = array<i64: 32, 32>}, {pipeline_mode = #tpu.pipeline_mode<synchronous>, transform_indices = @transform_3, window_bounds = array<i64: 1, 32>}, {transform_indices = @transform_4, window_bounds = array<i64: 1, 8, 32>}, {transform_indices = @transform_5, window_bounds = array<i64: 1, 8, 32>}]} {
    %c0 = arith.constant 0 : index
    %c0_0 = arith.constant 0 : index
    %c0_1 = arith.constant 0 : index
    %c0_2 = arith.constant 0 : index
    %0 = vector.load %arg1[%c0, %c0_0, %c0_1, %c0_2] : memref<1x8x3x32xf32, #tpu.memory_space<vmem>>, vector<1x8x1x32xf32>
    %1 = vector.shape_cast %0 : vector<1x8x1x32xf32> to vector<8x32xf32>
    %c0_3 = arith.constant 0 : index
    %c0_4 = arith.constant 0 : index
    %c1 = arith.constant 1 : index
    %c0_5 = arith.constant 0 : index
    %2 = vector.load %arg1[%c0_3, %c0_4, %c1, %c0_5] : memref<1x8x3x32xf32, #tpu.memory_space<vmem>>, vector<1x8x1x32xf32>
    %3 = vector.shape_cast %2 : vector<1x8x1x32xf32> to vector<8x32xf32>
    %c0_6 = arith.constant 0 : index
    %c0_7 = arith.constant 0 : index
    %c2 = arith.constant 2 : index
    %c0_8 = arith.constant 0 : index
    %4 = vector.load %arg1[%c0_6, %c0_7, %c2, %c0_8] : memref<1x8x3x32xf32, #tpu.memory_space<vmem>>, vector<1x8x1x32xf32>
    %5 = vector.shape_cast %4 : vector<1x8x1x32xf32> to vector<8x32xf32>
    %c0_9 = arith.constant 0 : index
    %c0_10 = arith.constant 0 : index
    %c0_11 = arith.constant 0 : index
    %6 = vector.load %arg2[%c0_9, %c0_10, %c0_11] : memref<1x1x8xf32, #tpu.memory_space<vmem>>, vector<1x1x8xf32>
    %7 = vector.shape_cast %6 : vector<1x1x8xf32> to vector<1x8xf32>
    %c0_12 = arith.constant 0 : index
    %c0_13 = arith.constant 0 : index
    %c0_14 = arith.constant 0 : index
    %8 = vector.load %arg5[%c0_12, %c0_13, %c0_14] : memref<1x8x32xf32, #tpu.memory_space<vmem>>, vector<1x8x32xf32>
    %9 = vector.shape_cast %8 : vector<1x8x32xf32> to vector<8x32xf32>
    %c0_15 = arith.constant 0 : index
    %c0_16 = arith.constant 0 : index
    %10 = vector.load %arg4[%c0_15, %c0_16] : memref<1x32xf32, #tpu.memory_space<vmem>>, vector<1x32xf32>
    %11 = vector.broadcast %10 : vector<1x32xf32> to vector<8x32xf32>
    %12 = arith.addf %9, %11 : vector<8x32xf32>
    %13 = vector.extract_strided_slice %1 {offsets = [0, 0], sizes = [8, 8], strides = [1, 1]} : vector<8x32xf32> to vector<8x8xf32>
    %14 = vector.extract_strided_slice %3 {offsets = [0, 0], sizes = [8, 8], strides = [1, 1]} : vector<8x32xf32> to vector<8x8xf32>
    %15 = vector.extract_strided_slice %5 {offsets = [0, 0], sizes = [8, 8], strides = [1, 1]} : vector<8x32xf32> to vector<8x8xf32>
    %cst = arith.constant dense<0.000000e+00> : vector<8x8xf32>
    %16 = tpu.matmul %13, %14, %cst {dimension_numbers = #tpu.dot_dimension_numbers<[1], [1], [0], [0], [0, 0, 1, 0], [], []>} : vector<8x8xf32>, vector<8x8xf32>, vector<8x8xf32> -> vector<8x8xf32>
    %cst_17 = arith.constant 0.353553385 : f32
    %17 = vector.broadcast %cst_17 : f32 to vector<8x8xf32>
    %18 = arith.mulf %16, %17 : vector<8x8xf32>
    %cst_18 = arith.constant 0.000000e+00 : f32
    %19 = vector.broadcast %cst_18 : f32 to vector<1x8xf32>
    %20 = arith.cmpf oeq, %7, %19 : vector<1x8xf32>
    %cst_19 = arith.constant -1.000000e+09 : f32
    %21 = vector.shape_cast %20 : vector<1x8xi1> to vector<1x8xi1>
    %22 = vector.broadcast %21 : vector<1x8xi1> to vector<8x8xi1>
    %23 = vector.broadcast %cst_19 : f32 to vector<8x8xf32>
    %24 = arith.select %22, %23, %18 : vector<8x8xi1>, vector<8x8xf32>
    %cst_20 = arith.constant dense<0xFF800000> : vector<8xf32>
    %25 = vector.multi_reduction <maximumf>, %24, %cst_20 [1] : vector<8x8xf32> to vector<8xf32>
    %26 = vector.shape_cast %25 : vector<8xf32> to vector<8x1xf32>
    %27 = vector.broadcast %26 : vector<8x1xf32> to vector<8x8xf32>
    %28 = arith.subf %24, %27 : vector<8x8xf32>
    %29 = math.exp %28 : vector<8x8xf32>
    %cst_21 = arith.constant dense<0.000000e+00> : vector<8xf32>
    %30 = vector.multi_reduction <add>, %29, %cst_21 [1] : vector<8x8xf32> to vector<8xf32>
    %31 = vector.shape_cast %30 : vector<8xf32> to vector<8x1xf32>
    %32 = tpu.reciprocal %31 {approx = true} : vector<8x1xf32> -> vector<8x1xf32>
    %33 = vector.broadcast %32 : vector<8x1xf32> to vector<8x8xf32>
    %34 = arith.mulf %29, %33 : vector<8x8xf32>
    %cst_22 = arith.constant dense<0.000000e+00> : vector<8x8xf32>
    %35 = tpu.matmul %34, %15, %cst_22 {dimension_numbers = #tpu.dot_dimension_numbers<[1], [0], [0], [1], [0, 0, 1, 1], [], []>} : vector<8x8xf32>, vector<8x8xf32>, vector<8x8xf32> -> vector<8x8xf32>
    %c0_23 = arith.constant 0 : index
    %c0_24 = arith.constant 0 : index
    %36 = vector.load %arg3[%c0_23, %c0_24] : memref<32x32xf32, #tpu.memory_space<vmem>>, vector<8x32xf32>
    %cst_25 = arith.constant dense<0.000000e+00> : vector<8x32xf32>
    %37 = tpu.matmul %35, %36, %cst_25 {dimension_numbers = #tpu.dot_dimension_numbers<[1], [0], [0], [1], [0, 0, 1, 1], [], []>} : vector<8x8xf32>, vector<8x32xf32>, vector<8x32xf32> -> vector<8x32xf32>
    %38 = arith.addf %12, %37 : vector<8x32xf32>
    %39 = vector.extract_strided_slice %1 {offsets = [0, 8], sizes = [8, 8], strides = [1, 1]} : vector<8x32xf32> to vector<8x8xf32>
    %40 = vector.extract_strided_slice %3 {offsets = [0, 8], sizes = [8, 8], strides = [1, 1]} : vector<8x32xf32> to vector<8x8xf32>
    %41 = vector.extract_strided_slice %5 {offsets = [0, 8], sizes = [8, 8], strides = [1, 1]} : vector<8x32xf32> to vector<8x8xf32>
    %cst_26 = arith.constant dense<0.000000e+00> : vector<8x8xf32>
    %42 = tpu.matmul %39, %40, %cst_26 {dimension_numbers = #tpu.dot_dimension_numbers<[1], [1], [0], [0], [0, 0, 1, 0], [], []>} : vector<8x8xf32>, vector<8x8xf32>, vector<8x8xf32> -> vector<8x8xf32>
    %cst_27 = arith.constant 0.353553385 : f32
    %43 = vector.broadcast %cst_27 : f32 to vector<8x8xf32>
    %44 = arith.mulf %42, %43 : vector<8x8xf32>
    %cst_28 = arith.constant 0.000000e+00 : f32
    %45 = vector.broadcast %cst_28 : f32 to vector<1x8xf32>
    %46 = arith.cmpf oeq, %7, %45 : vector<1x8xf32>
    %cst_29 = arith.constant -1.000000e+09 : f32
    %47 = vector.shape_cast %46 : vector<1x8xi1> to vector<1x8xi1>
    %48 = vector.broadcast %47 : vector<1x8xi1> to vector<8x8xi1>
    %49 = vector.broadcast %cst_29 : f32 to vector<8x8xf32>
    %50 = arith.select %48, %49, %44 : vector<8x8xi1>, vector<8x8xf32>
    %cst_30 = arith.constant dense<0xFF800000> : vector<8xf32>
    %51 = vector.multi_reduction <maximumf>, %50, %cst_30 [1] : vector<8x8xf32> to vector<8xf32>
    %52 = vector.shape_cast %51 : vector<8xf32> to vector<8x1xf32>
    %53 = vector.broadcast %52 : vector<8x1xf32> to vector<8x8xf32>
    %54 = arith.subf %50, %53 : vector<8x8xf32>
    %55 = math.exp %54 : vector<8x8xf32>
    %cst_31 = arith.constant dense<0.000000e+00> : vector<8xf32>
    %56 = vector.multi_reduction <add>, %55, %cst_31 [1] : vector<8x8xf32> to vector<8xf32>
    %57 = vector.shape_cast %56 : vector<8xf32> to vector<8x1xf32>
    %58 = tpu.reciprocal %57 {approx = true} : vector<8x1xf32> -> vector<8x1xf32>
    %59 = vector.broadcast %58 : vector<8x1xf32> to vector<8x8xf32>
    %60 = arith.mulf %55, %59 : vector<8x8xf32>
    %cst_32 = arith.constant dense<0.000000e+00> : vector<8x8xf32>
    %61 = tpu.matmul %60, %41, %cst_32 {dimension_numbers = #tpu.dot_dimension_numbers<[1], [0], [0], [1], [0, 0, 1, 1], [], []>} : vector<8x8xf32>, vector<8x8xf32>, vector<8x8xf32> -> vector<8x8xf32>
    %c8 = arith.constant 8 : index
    %c0_33 = arith.constant 0 : index
    %62 = vector.load %arg3[%c8, %c0_33] : memref<32x32xf32, #tpu.memory_space<vmem>>, vector<8x32xf32>
    %cst_34 = arith.constant dense<0.000000e+00> : vector<8x32xf32>
    %63 = tpu.matmul %61, %62, %cst_34 {dimension_numbers = #tpu.dot_dimension_numbers<[1], [0], [0], [1], [0, 0, 1, 1], [], []>} : vector<8x8xf32>, vector<8x32xf32>, vector<8x32xf32> -> vector<8x32xf32>
    %64 = arith.addf %38, %63 : vector<8x32xf32>
    %65 = vector.extract_strided_slice %1 {offsets = [0, 16], sizes = [8, 8], strides = [1, 1]} : vector<8x32xf32> to vector<8x8xf32>
    %66 = vector.extract_strided_slice %3 {offsets = [0, 16], sizes = [8, 8], strides = [1, 1]} : vector<8x32xf32> to vector<8x8xf32>
    %67 = vector.extract_strided_slice %5 {offsets = [0, 16], sizes = [8, 8], strides = [1, 1]} : vector<8x32xf32> to vector<8x8xf32>
    %cst_35 = arith.constant dense<0.000000e+00> : vector<8x8xf32>
    %68 = tpu.matmul %65, %66, %cst_35 {dimension_numbers = #tpu.dot_dimension_numbers<[1], [1], [0], [0], [0, 0, 1, 0], [], []>} : vector<8x8xf32>, vector<8x8xf32>, vector<8x8xf32> -> vector<8x8xf32>
    %cst_36 = arith.constant 0.353553385 : f32
    %69 = vector.broadcast %cst_36 : f32 to vector<8x8xf32>
    %70 = arith.mulf %68, %69 : vector<8x8xf32>
    %cst_37 = arith.constant 0.000000e+00 : f32
    %71 = vector.broadcast %cst_37 : f32 to vector<1x8xf32>
    %72 = arith.cmpf oeq, %7, %71 : vector<1x8xf32>
    %cst_38 = arith.constant -1.000000e+09 : f32
    %73 = vector.shape_cast %72 : vector<1x8xi1> to vector<1x8xi1>
    %74 = vector.broadcast %73 : vector<1x8xi1> to vector<8x8xi1>
    %75 = vector.broadcast %cst_38 : f32 to vector<8x8xf32>
    %76 = arith.select %74, %75, %70 : vector<8x8xi1>, vector<8x8xf32>
    %cst_39 = arith.constant dense<0xFF800000> : vector<8xf32>
    %77 = vector.multi_reduction <maximumf>, %76, %cst_39 [1] : vector<8x8xf32> to vector<8xf32>
    %78 = vector.shape_cast %77 : vector<8xf32> to vector<8x1xf32>
    %79 = vector.broadcast %78 : vector<8x1xf32> to vector<8x8xf32>
    %80 = arith.subf %76, %79 : vector<8x8xf32>
    %81 = math.exp %80 : vector<8x8xf32>
    %cst_40 = arith.constant dense<0.000000e+00> : vector<8xf32>
    %82 = vector.multi_reduction <add>, %81, %cst_40 [1] : vector<8x8xf32> to vector<8xf32>
    %83 = vector.shape_cast %82 : vector<8xf32> to vector<8x1xf32>
    %84 = tpu.reciprocal %83 {approx = true} : vector<8x1xf32> -> vector<8x1xf32>
    %85 = vector.broadcast %84 : vector<8x1xf32> to vector<8x8xf32>
    %86 = arith.mulf %81, %85 : vector<8x8xf32>
    %cst_41 = arith.constant dense<0.000000e+00> : vector<8x8xf32>
    %87 = tpu.matmul %86, %67, %cst_41 {dimension_numbers = #tpu.dot_dimension_numbers<[1], [0], [0], [1], [0, 0, 1, 1], [], []>} : vector<8x8xf32>, vector<8x8xf32>, vector<8x8xf32> -> vector<8x8xf32>
    %c16 = arith.constant 16 : index
    %c0_42 = arith.constant 0 : index
    %88 = vector.load %arg3[%c16, %c0_42] : memref<32x32xf32, #tpu.memory_space<vmem>>, vector<8x32xf32>
    %cst_43 = arith.constant dense<0.000000e+00> : vector<8x32xf32>
    %89 = tpu.matmul %87, %88, %cst_43 {dimension_numbers = #tpu.dot_dimension_numbers<[1], [0], [0], [1], [0, 0, 1, 1], [], []>} : vector<8x8xf32>, vector<8x32xf32>, vector<8x32xf32> -> vector<8x32xf32>
    %90 = arith.addf %64, %89 : vector<8x32xf32>
    %91 = vector.extract_strided_slice %1 {offsets = [0, 24], sizes = [8, 8], strides = [1, 1]} : vector<8x32xf32> to vector<8x8xf32>
    %92 = vector.extract_strided_slice %3 {offsets = [0, 24], sizes = [8, 8], strides = [1, 1]} : vector<8x32xf32> to vector<8x8xf32>
    %93 = vector.extract_strided_slice %5 {offsets = [0, 24], sizes = [8, 8], strides = [1, 1]} : vector<8x32xf32> to vector<8x8xf32>
    %cst_44 = arith.constant dense<0.000000e+00> : vector<8x8xf32>
    %94 = tpu.matmul %91, %92, %cst_44 {dimension_numbers = #tpu.dot_dimension_numbers<[1], [1], [0], [0], [0, 0, 1, 0], [], []>} : vector<8x8xf32>, vector<8x8xf32>, vector<8x8xf32> -> vector<8x8xf32>
    %cst_45 = arith.constant 0.353553385 : f32
    %95 = vector.broadcast %cst_45 : f32 to vector<8x8xf32>
    %96 = arith.mulf %94, %95 : vector<8x8xf32>
    %cst_46 = arith.constant 0.000000e+00 : f32
    %97 = vector.broadcast %cst_46 : f32 to vector<1x8xf32>
    %98 = arith.cmpf oeq, %7, %97 : vector<1x8xf32>
    %cst_47 = arith.constant -1.000000e+09 : f32
    %99 = vector.shape_cast %98 : vector<1x8xi1> to vector<1x8xi1>
    %100 = vector.broadcast %99 : vector<1x8xi1> to vector<8x8xi1>
    %101 = vector.broadcast %cst_47 : f32 to vector<8x8xf32>
    %102 = arith.select %100, %101, %96 : vector<8x8xi1>, vector<8x8xf32>
    %cst_48 = arith.constant dense<0xFF800000> : vector<8xf32>
    %103 = vector.multi_reduction <maximumf>, %102, %cst_48 [1] : vector<8x8xf32> to vector<8xf32>
    %104 = vector.shape_cast %103 : vector<8xf32> to vector<8x1xf32>
    %105 = vector.broadcast %104 : vector<8x1xf32> to vector<8x8xf32>
    %106 = arith.subf %102, %105 : vector<8x8xf32>
    %107 = math.exp %106 : vector<8x8xf32>
    %cst_49 = arith.constant dense<0.000000e+00> : vector<8xf32>
    %108 = vector.multi_reduction <add>, %107, %cst_49 [1] : vector<8x8xf32> to vector<8xf32>
    %109 = vector.shape_cast %108 : vector<8xf32> to vector<8x1xf32>
    %110 = tpu.reciprocal %109 {approx = true} : vector<8x1xf32> -> vector<8x1xf32>
    %111 = vector.broadcast %110 : vector<8x1xf32> to vector<8x8xf32>
    %112 = arith.mulf %107, %111 : vector<8x8xf32>
    %cst_50 = arith.constant dense<0.000000e+00> : vector<8x8xf32>
    %113 = tpu.matmul %112, %93, %cst_50 {dimension_numbers = #tpu.dot_dimension_numbers<[1], [0], [0], [1], [0, 0, 1, 1], [], []>} : vector<8x8xf32>, vector<8x8xf32>, vector<8x8xf32> -> vector<8x8xf32>
    %c24 = arith.constant 24 : index
    %c0_51 = arith.constant 0 : index
    %114 = vector.load %arg3[%c24, %c0_51] : memref<32x32xf32, #tpu.memory_space<vmem>>, vector<8x32xf32>
    %cst_52 = arith.constant dense<0.000000e+00> : vector<8x32xf32>
    %115 = tpu.matmul %113, %114, %cst_52 {dimension_numbers = #tpu.dot_dimension_numbers<[1], [0], [0], [1], [0, 0, 1, 1], [], []>} : vector<8x8xf32>, vector<8x32xf32>, vector<8x32xf32> -> vector<8x32xf32>
    %116 = arith.addf %90, %115 : vector<8x32xf32>
    %c0_53 = arith.constant 0 : index
    %c0_54 = arith.constant 0 : index
    %c0_55 = arith.constant 0 : index
    %117 = vector.load %arg6[%c0_53, %c0_54, %c0_55] : memref<1x8x32xf32, #tpu.memory_space<vmem>>, vector<1x8x32xf32>
    %118 = vector.shape_cast %117 : vector<1x8x32xf32> to vector<8x32xf32>
    %119 = vector.shape_cast %116 : vector<8x32xf32> to vector<1x8x32xf32>
    tpu.vector_store %arg6[%c0_53, %c0_54, %c0_55], %119 {strides = array<i32>} : memref<1x8x32xf32, #tpu.memory_space<vmem>>, vector<1x8x32xf32>,
    return
  }
  func.func @transform_0(%arg0: i32) -> (i32, i32, i32, i32) {
    %c0_i32 = arith.constant 0 : i32
    %c0_i32_0 = arith.constant 0 : i32
    %c0_i32_1 = arith.constant 0 : i32
    %c0_i32_2 = arith.constant 0 : i32
    return %arg0, %c0_i32, %c0_i32_0, %c0_i32_1 : i32, i32, i32, i32
  }
  func.func @transform_1(%arg0: i32) -> (i32, i32, i32) {
    %c0_i32 = arith.constant 0 : i32
    %c0_i32_0 = arith.constant 0 : i32
    %c0_i32_1 = arith.constant 0 : i32
    return %arg0, %c0_i32, %c0_i32_0 : i32, i32, i32
  }
  func.func @transform_2(%arg0: i32) -> (i32, i32) {
    %c0_i32 = arith.constant 0 : i32
    %c0_i32_0 = arith.constant 0 : i32
    %c0_i32_1 = arith.constant 0 : i32
    return %c0_i32, %c0_i32_0 : i32, i32
  }
  func.func @transform_3(%arg0: i32) -> (i32, i32) {
    %c0_i32 = arith.constant 0 : i32
    %c0_i32_0 = arith.constant 0 : i32
    %c0_i32_1 = arith.constant 0 : i32
    return %c0_i32, %c0_i32_0 : i32, i32
  }
  func.func @transform_4(%arg0: i32) -> (i32, i32, i32) {
    %c0_i32 = arith.constant 0 : i32
    %c0_i32_0 = arith.constant 0 : i32
    %c0_i32_1 = arith.constant 0 : i32
    return %arg0, %c0_i32, %c0_i32_0 : i32, i32, i32
  }
  func.func @transform_5(%arg0: i32) -> (i32, i32, i32) {
    %c0_i32 = arith.constant 0 : i32
    %c0_i32_0 = arith.constant 0 : i32
    %c0_i32_1 = arith.constant 0 : i32
    return %arg0, %c0_i32, %c0_i32_0 : i32, i32, i32
  }
}

module attributes {stable_mosaic.version = 11 : i64} {
  func.func @_ln_qkv_kernel(%arg0: i32, %arg1: memref<16x32xf32, #tpu.memory_space<vmem>>, %arg2: memref<1x32xf32, #tpu.memory_space<vmem>>, %arg3: memref<1x32xf32, #tpu.memory_space<vmem>>, %arg4: memref<32x96xf32, #tpu.memory_space<vmem>>, %arg5: memref<1x96xf32, #tpu.memory_space<vmem>>, %arg6: memref<16x96xf32, #tpu.memory_space<vmem>>) attributes {dimension_semantics = [#tpu.dimension_semantics<parallel>], iteration_bounds = array<i64: 1>, scalar_prefetch = 0 : i64, scratch_operands = 0 : i64, tpu.core_type = #tpu.core_type<tc>, window_params = [{transform_indices = @transform_0, window_bounds = array<i64: 16, 32>}, {pipeline_mode = #tpu.pipeline_mode<synchronous>, transform_indices = @transform_1, window_bounds = array<i64: 1, 32>}, {pipeline_mode = #tpu.pipeline_mode<synchronous>, transform_indices = @transform_2, window_bounds = array<i64: 1, 32>}, {pipeline_mode = #tpu.pipeline_mode<synchronous>, transform_indices = @transform_3, window_bounds = array<i64: 32, 96>}, {pipeline_mode = #tpu.pipeline_mode<synchronous>, transform_indices = @transform_4, window_bounds = array<i64: 1, 96>}, {transform_indices = @transform_5, window_bounds = array<i64: 16, 96>}]} {
    %c0 = arith.constant 0 : index
    %c0_0 = arith.constant 0 : index
    %0 = vector.load %arg1[%c0, %c0_0] : memref<16x32xf32, #tpu.memory_space<vmem>>, vector<16x32xf32>
    %c0_1 = arith.constant 0 : index
    %c0_2 = arith.constant 0 : index
    %1 = vector.load %arg2[%c0_1, %c0_2] : memref<1x32xf32, #tpu.memory_space<vmem>>, vector<1x32xf32>
    %c0_3 = arith.constant 0 : index
    %c0_4 = arith.constant 0 : index
    %2 = vector.load %arg3[%c0_3, %c0_4] : memref<1x32xf32, #tpu.memory_space<vmem>>, vector<1x32xf32>
    %cst = arith.constant dense<0.000000e+00> : vector<16xf32>
    %3 = vector.multi_reduction <add>, %0, %cst [1] : vector<16x32xf32> to vector<16xf32>
    %4 = vector.shape_cast %3 : vector<16xf32> to vector<16x1xf32>
    %cst_5 = arith.constant 3.200000e+01 : f32
    %5 = vector.broadcast %cst_5 : f32 to vector<16x1xf32>
    %6 = arith.divf %4, %5 : vector<16x1xf32>
    %7 = vector.broadcast %6 : vector<16x1xf32> to vector<16x32xf32>
    %8 = arith.subf %0, %7 : vector<16x32xf32>
    %9 = arith.mulf %8, %8 : vector<16x32xf32>
    %cst_6 = arith.constant dense<0.000000e+00> : vector<16xf32>
    %10 = vector.multi_reduction <add>, %9, %cst_6 [1] : vector<16x32xf32> to vector<16xf32>
    %11 = vector.shape_cast %10 : vector<16xf32> to vector<16x1xf32>
    %cst_7 = arith.constant 3.100000e+01 : f32
    %12 = vector.broadcast %cst_7 : f32 to vector<16x1xf32>
    %13 = arith.divf %11, %12 : vector<16x1xf32>
    %cst_8 = arith.constant 9.99999997E-7 : f32
    %14 = vector.broadcast %cst_8 : f32 to vector<16x1xf32>
    %15 = arith.addf %13, %14 : vector<16x1xf32>
    %16 = math.rsqrt %15 : vector<16x1xf32>
    %17 = vector.broadcast %16 : vector<16x1xf32> to vector<16x32xf32>
    %18 = arith.mulf %8, %17 : vector<16x32xf32>
    %19 = vector.broadcast %1 : vector<1x32xf32> to vector<16x32xf32>
    %20 = arith.mulf %19, %18 : vector<16x32xf32>
    %21 = vector.broadcast %2 : vector<1x32xf32> to vector<16x32xf32>
    %22 = arith.addf %20, %21 : vector<16x32xf32>
    %c0_9 = arith.constant 0 : index
    %c0_10 = arith.constant 0 : index
    %23 = vector.load %arg4[%c0_9, %c0_10] : memref<32x96xf32, #tpu.memory_space<vmem>>, vector<32x96xf32>
    %cst_11 = arith.constant dense<0.000000e+00> : vector<16x96xf32>
    %24 = tpu.matmul %22, %23, %cst_11 {dimension_numbers = #tpu.dot_dimension_numbers<[1], [0], [0], [1], [0, 0, 1, 1], [], []>} : vector<16x32xf32>, vector<32x96xf32>, vector<16x96xf32> -> vector<16x96xf32>
    %c0_12 = arith.constant 0 : index
    %c0_13 = arith.constant 0 : index
    %25 = vector.load %arg5[%c0_12, %c0_13] : memref<1x96xf32, #tpu.memory_space<vmem>>, vector<1x96xf32>
    %26 = vector.broadcast %25 : vector<1x96xf32> to vector<16x96xf32>
    %27 = arith.addf %24, %26 : vector<16x96xf32>
    %c0_14 = arith.constant 0 : index
    %c0_15 = arith.constant 0 : index
    %28 = vector.load %arg6[%c0_14, %c0_15] : memref<16x96xf32, #tpu.memory_space<vmem>>, vector<16x96xf32>
    tpu.vector_store %arg6[%c0_14, %c0_15], %27 {strides = array<i32>} : memref<16x96xf32, #tpu.memory_space<vmem>>, vector<16x96xf32>,
    return
  }
  func.func @transform_0(%arg0: i32) -> (i32, i32) {
    %c0_i32 = arith.constant 0 : i32
    %c0_i32_0 = arith.constant 0 : i32
    return %arg0, %c0_i32 : i32, i32
  }
  func.func @transform_1(%arg0: i32) -> (i32, i32) {
    %c0_i32 = arith.constant 0 : i32
    %c0_i32_0 = arith.constant 0 : i32
    %c0_i32_1 = arith.constant 0 : i32
    return %c0_i32, %c0_i32_0 : i32, i32
  }
  func.func @transform_2(%arg0: i32) -> (i32, i32) {
    %c0_i32 = arith.constant 0 : i32
    %c0_i32_0 = arith.constant 0 : i32
    %c0_i32_1 = arith.constant 0 : i32
    return %c0_i32, %c0_i32_0 : i32, i32
  }
  func.func @transform_3(%arg0: i32) -> (i32, i32) {
    %c0_i32 = arith.constant 0 : i32
    %c0_i32_0 = arith.constant 0 : i32
    %c0_i32_1 = arith.constant 0 : i32
    return %c0_i32, %c0_i32_0 : i32, i32
  }
  func.func @transform_4(%arg0: i32) -> (i32, i32) {
    %c0_i32 = arith.constant 0 : i32
    %c0_i32_0 = arith.constant 0 : i32
    %c0_i32_1 = arith.constant 0 : i32
    return %c0_i32, %c0_i32_0 : i32, i32
  }
  func.func @transform_5(%arg0: i32) -> (i32, i32) {
    %c0_i32 = arith.constant 0 : i32
    %c0_i32_0 = arith.constant 0 : i32
    return %arg0, %c0_i32 : i32, i32
  }
}

module attributes {stable_mosaic.version = 11 : i64} {
  func.func @_ln_ffn_residual_kernel(%arg0: i32, %arg1: memref<16x32xf32, #tpu.memory_space<vmem>>, %arg2: memref<1x32xf32, #tpu.memory_space<vmem>>, %arg3: memref<1x32xf32, #tpu.memory_space<vmem>>, %arg4: memref<32x64xf32, #tpu.memory_space<vmem>>, %arg5: memref<1x64xf32, #tpu.memory_space<vmem>>, %arg6: memref<64x32xf32, #tpu.memory_space<vmem>>, %arg7: memref<1x32xf32, #tpu.memory_space<vmem>>, %arg8: memref<16x32xf32, #tpu.memory_space<vmem>>) attributes {dimension_semantics = [#tpu.dimension_semantics<parallel>], iteration_bounds = array<i64: 1>, scalar_prefetch = 0 : i64, scratch_operands = 0 : i64, tpu.core_type = #tpu.core_type<tc>, window_params = [{transform_indices = @transform_0, window_bounds = array<i64: 16, 32>}, {pipeline_mode = #tpu.pipeline_mode<synchronous>, transform_indices = @transform_1, window_bounds = array<i64: 1, 32>}, {pipeline_mode = #tpu.pipeline_mode<synchronous>, transform_indices = @transform_2, window_bounds = array<i64: 1, 32>}, {pipeline_mode = #tpu.pipeline_mode<synchronous>, transform_indices = @transform_3, window_bounds = array<i64: 32, 64>}, {pipeline_mode = #tpu.pipeline_mode<synchronous>, transform_indices = @transform_4, window_bounds = array<i64: 1, 64>}, {pipeline_mode = #tpu.pipeline_mode<synchronous>, transform_indices = @transform_5, window_bounds = array<i64: 64, 32>}, {pipeline_mode = #tpu.pipeline_mode<synchronous>, transform_indices = @transform_6, window_bounds = array<i64: 1, 32>}, {transform_indices = @transform_7, window_bounds = array<i64: 16, 32>}]} {
    %c0 = arith.constant 0 : index
    %c0_0 = arith.constant 0 : index
    %0 = vector.load %arg1[%c0, %c0_0] : memref<16x32xf32, #tpu.memory_space<vmem>>, vector<16x32xf32>
    %c0_1 = arith.constant 0 : index
    %c0_2 = arith.constant 0 : index
    %1 = vector.load %arg2[%c0_1, %c0_2] : memref<1x32xf32, #tpu.memory_space<vmem>>, vector<1x32xf32>
    %c0_3 = arith.constant 0 : index
    %c0_4 = arith.constant 0 : index
    %2 = vector.load %arg3[%c0_3, %c0_4] : memref<1x32xf32, #tpu.memory_space<vmem>>, vector<1x32xf32>
    %cst = arith.constant dense<0.000000e+00> : vector<16xf32>
    %3 = vector.multi_reduction <add>, %0, %cst [1] : vector<16x32xf32> to vector<16xf32>
    %4 = vector.shape_cast %3 : vector<16xf32> to vector<16x1xf32>
    %cst_5 = arith.constant 3.200000e+01 : f32
    %5 = vector.broadcast %cst_5 : f32 to vector<16x1xf32>
    %6 = arith.divf %4, %5 : vector<16x1xf32>
    %7 = vector.broadcast %6 : vector<16x1xf32> to vector<16x32xf32>
    %8 = arith.subf %0, %7 : vector<16x32xf32>
    %9 = arith.mulf %8, %8 : vector<16x32xf32>
    %cst_6 = arith.constant dense<0.000000e+00> : vector<16xf32>
    %10 = vector.multi_reduction <add>, %9, %cst_6 [1] : vector<16x32xf32> to vector<16xf32>
    %11 = vector.shape_cast %10 : vector<16xf32> to vector<16x1xf32>
    %cst_7 = arith.constant 3.100000e+01 : f32
    %12 = vector.broadcast %cst_7 : f32 to vector<16x1xf32>
    %13 = arith.divf %11, %12 : vector<16x1xf32>
    %cst_8 = arith.constant 9.99999997E-7 : f32
    %14 = vector.broadcast %cst_8 : f32 to vector<16x1xf32>
    %15 = arith.addf %13, %14 : vector<16x1xf32>
    %16 = math.rsqrt %15 : vector<16x1xf32>
    %17 = vector.broadcast %16 : vector<16x1xf32> to vector<16x32xf32>
    %18 = arith.mulf %8, %17 : vector<16x32xf32>
    %19 = vector.broadcast %1 : vector<1x32xf32> to vector<16x32xf32>
    %20 = arith.mulf %19, %18 : vector<16x32xf32>
    %21 = vector.broadcast %2 : vector<1x32xf32> to vector<16x32xf32>
    %22 = arith.addf %20, %21 : vector<16x32xf32>
    %c0_9 = arith.constant 0 : index
    %c0_10 = arith.constant 0 : index
    %23 = vector.load %arg4[%c0_9, %c0_10] : memref<32x64xf32, #tpu.memory_space<vmem>>, vector<32x64xf32>
    %cst_11 = arith.constant dense<0.000000e+00> : vector<16x64xf32>
    %24 = tpu.matmul %22, %23, %cst_11 {dimension_numbers = #tpu.dot_dimension_numbers<[1], [0], [0], [1], [0, 0, 1, 1], [], []>} : vector<16x32xf32>, vector<32x64xf32>, vector<16x64xf32> -> vector<16x64xf32>
    %c0_12 = arith.constant 0 : index
    %c0_13 = arith.constant 0 : index
    %25 = vector.load %arg5[%c0_12, %c0_13] : memref<1x64xf32, #tpu.memory_space<vmem>>, vector<1x64xf32>
    %26 = vector.broadcast %25 : vector<1x64xf32> to vector<16x64xf32>
    %27 = arith.addf %24, %26 : vector<16x64xf32>
    %cst_14 = arith.constant 0.000000e+00 : f32
    %28 = vector.broadcast %cst_14 : f32 to vector<16x64xf32>
    %29 = arith.maximumf %27, %28 : vector<16x64xf32>
    %c0_15 = arith.constant 0 : index
    %c0_16 = arith.constant 0 : index
    %30 = vector.load %arg6[%c0_15, %c0_16] : memref<64x32xf32, #tpu.memory_space<vmem>>, vector<64x32xf32>
    %cst_17 = arith.constant dense<0.000000e+00> : vector<16x32xf32>
    %31 = tpu.matmul %29, %30, %cst_17 {dimension_numbers = #tpu.dot_dimension_numbers<[1], [0], [0], [1], [0, 0, 1, 1], [], []>} : vector<16x64xf32>, vector<64x32xf32>, vector<16x32xf32> -> vector<16x32xf32>
    %c0_18 = arith.constant 0 : index
    %c0_19 = arith.constant 0 : index
    %32 = vector.load %arg7[%c0_18, %c0_19] : memref<1x32xf32, #tpu.memory_space<vmem>>, vector<1x32xf32>
    %33 = vector.broadcast %32 : vector<1x32xf32> to vector<16x32xf32>
    %34 = arith.addf %31, %33 : vector<16x32xf32>
    %35 = arith.addf %0, %34 : vector<16x32xf32>
    %c0_20 = arith.constant 0 : index
    %c0_21 = arith.constant 0 : index
    %36 = vector.load %arg8[%c0_20, %c0_21] : memref<16x32xf32, #tpu.memory_space<vmem>>, vector<16x32xf32>
    tpu.vector_store %arg8[%c0_20, %c0_21], %35 {strides = array<i32>} : memref<16x32xf32, #tpu.memory_space<vmem>>, vector<16x32xf32>,
    return
  }
  func.func @transform_0(%arg0: i32) -> (i32, i32) {
    %c0_i32 = arith.constant 0 : i32
    %c0_i32_0 = arith.constant 0 : i32
    return %arg0, %c0_i32 : i32, i32
  }
  func.func @transform_1(%arg0: i32) -> (i32, i32) {
    %c0_i32 = arith.constant 0 : i32
    %c0_i32_0 = arith.constant 0 : i32
    %c0_i32_1 = arith.constant 0 : i32
    return %c0_i32, %c0_i32_0 : i32, i32
  }
  func.func @transform_2(%arg0: i32) -> (i32, i32) {
    %c0_i32 = arith.constant 0 : i32
    %c0_i32_0 = arith.constant 0 : i32
    %c0_i32_1 = arith.constant 0 : i32
    return %c0_i32, %c0_i32_0 : i32, i32
  }
  func.func @transform_3(%arg0: i32) -> (i32, i32) {
    %c0_i32 = arith.constant 0 : i32
    %c0_i32_0 = arith.constant 0 : i32
    %c0_i32_1 = arith.constant 0 : i32
    return %c0_i32, %c0_i32_0 : i32, i32
  }
  func.func @transform_4(%arg0: i32) -> (i32, i32) {
    %c0_i32 = arith.constant 0 : i32
    %c0_i32_0 = arith.constant 0 : i32
    %c0_i32_1 = arith.constant 0 : i32
    return %c0_i32, %c0_i32_0 : i32, i32
  }
  func.func @transform_5(%arg0: i32) -> (i32, i32) {
    %c0_i32 = arith.constant 0 : i32
    %c0_i32_0 = arith.constant 0 : i32
    %c0_i32_1 = arith.constant 0 : i32
    return %c0_i32, %c0_i32_0 : i32, i32
  }
  func.func @transform_6(%arg0: i32) -> (i32, i32) {
    %c0_i32 = arith.constant 0 : i32
    %c0_i32_0 = arith.constant 0 : i32
    %c0_i32_1 = arith.constant 0 : i32
    return %c0_i32, %c0_i32_0 : i32, i32
  }
  func.func @transform_7(%arg0: i32) -> (i32, i32) {
    %c0_i32 = arith.constant 0 : i32
    %c0_i32_0 = arith.constant 0 : i32
    return %arg0, %c0_i32 : i32, i32
  }
}

module attributes {stable_mosaic.version = 11 : i64} {
  func.func @_ln_kernel(%arg0: i32, %arg1: memref<16x32xf32, #tpu.memory_space<vmem>>, %arg2: memref<1x32xf32, #tpu.memory_space<vmem>>, %arg3: memref<1x32xf32, #tpu.memory_space<vmem>>, %arg4: memref<16x32xf32, #tpu.memory_space<vmem>>) attributes {dimension_semantics = [#tpu.dimension_semantics<parallel>], iteration_bounds = array<i64: 1>, scalar_prefetch = 0 : i64, scratch_operands = 0 : i64, tpu.core_type = #tpu.core_type<tc>, window_params = [{transform_indices = @transform_0, window_bounds = array<i64: 16, 32>}, {pipeline_mode = #tpu.pipeline_mode<synchronous>, transform_indices = @transform_1, window_bounds = array<i64: 1, 32>}, {pipeline_mode = #tpu.pipeline_mode<synchronous>, transform_indices = @transform_2, window_bounds = array<i64: 1, 32>}, {transform_indices = @transform_3, window_bounds = array<i64: 16, 32>}]} {
    %c0 = arith.constant 0 : index
    %c0_0 = arith.constant 0 : index
    %0 = vector.load %arg1[%c0, %c0_0] : memref<16x32xf32, #tpu.memory_space<vmem>>, vector<16x32xf32>
    %c0_1 = arith.constant 0 : index
    %c0_2 = arith.constant 0 : index
    %1 = vector.load %arg2[%c0_1, %c0_2] : memref<1x32xf32, #tpu.memory_space<vmem>>, vector<1x32xf32>
    %c0_3 = arith.constant 0 : index
    %c0_4 = arith.constant 0 : index
    %2 = vector.load %arg3[%c0_3, %c0_4] : memref<1x32xf32, #tpu.memory_space<vmem>>, vector<1x32xf32>
    %cst = arith.constant dense<0.000000e+00> : vector<16xf32>
    %3 = vector.multi_reduction <add>, %0, %cst [1] : vector<16x32xf32> to vector<16xf32>
    %4 = vector.shape_cast %3 : vector<16xf32> to vector<16x1xf32>
    %cst_5 = arith.constant 3.200000e+01 : f32
    %5 = vector.broadcast %cst_5 : f32 to vector<16x1xf32>
    %6 = arith.divf %4, %5 : vector<16x1xf32>
    %7 = vector.broadcast %6 : vector<16x1xf32> to vector<16x32xf32>
    %8 = arith.subf %0, %7 : vector<16x32xf32>
    %9 = arith.mulf %8, %8 : vector<16x32xf32>
    %cst_6 = arith.constant dense<0.000000e+00> : vector<16xf32>
    %10 = vector.multi_reduction <add>, %9, %cst_6 [1] : vector<16x32xf32> to vector<16xf32>
    %11 = vector.shape_cast %10 : vector<16xf32> to vector<16x1xf32>
    %cst_7 = arith.constant 3.100000e+01 : f32
    %12 = vector.broadcast %cst_7 : f32 to vector<16x1xf32>
    %13 = arith.divf %11, %12 : vector<16x1xf32>
    %cst_8 = arith.constant 9.99999997E-7 : f32
    %14 = vector.broadcast %cst_8 : f32 to vector<16x1xf32>
    %15 = arith.addf %13, %14 : vector<16x1xf32>
    %16 = math.rsqrt %15 : vector<16x1xf32>
    %17 = vector.broadcast %16 : vector<16x1xf32> to vector<16x32xf32>
    %18 = arith.mulf %8, %17 : vector<16x32xf32>
    %19 = vector.broadcast %1 : vector<1x32xf32> to vector<16x32xf32>
    %20 = arith.mulf %19, %18 : vector<16x32xf32>
    %21 = vector.broadcast %2 : vector<1x32xf32> to vector<16x32xf32>
    %22 = arith.addf %20, %21 : vector<16x32xf32>
    %c0_9 = arith.constant 0 : index
    %c0_10 = arith.constant 0 : index
    %23 = vector.load %arg4[%c0_9, %c0_10] : memref<16x32xf32, #tpu.memory_space<vmem>>, vector<16x32xf32>
    tpu.vector_store %arg4[%c0_9, %c0_10], %22 {strides = array<i32>} : memref<16x32xf32, #tpu.memory_space<vmem>>, vector<16x32xf32>,
    return
  }
  func.func @transform_0(%arg0: i32) -> (i32, i32) {
    %c0_i32 = arith.constant 0 : i32
    %c0_i32_0 = arith.constant 0 : i32
    return %arg0, %c0_i32 : i32, i32
  }
  func.func @transform_1(%arg0: i32) -> (i32, i32) {
    %c0_i32 = arith.constant 0 : i32
    %c0_i32_0 = arith.constant 0 : i32
    %c0_i32_1 = arith.constant 0 : i32
    return %c0_i32, %c0_i32_0 : i32, i32
  }
  func.func @transform_2(%arg0: i32) -> (i32, i32) {
    %c0_i32 = arith.constant 0 : i32
    %c0_i32_0 = arith.constant 0 : i32
    %c0_i32_1 = arith.constant 0 : i32
    return %c0_i32, %c0_i32_0 : i32, i32
  }
  func.func @transform_3(%arg0: i32) -> (i32, i32) {
    %c0_i32 = arith.constant 0 : i32
    %c0_i32_0 = arith.constant 0 : i32
    return %arg0, %c0_i32 : i32, i32
  }
}

</mosaic_0001>

<llo_original>
// kernel: encoder_forward.7
$region0: #{encoder_forward.7}
  #allocation0 [shape = 'u32[]', space=smem, size = 0x4, offset = 0x4, fixed_abs, tag = 'smem constant byte address 0x4 - core index']
  #allocation1 [shape = 'u32[144,128]{1,0:T(1,128)}', space=vmem, size = 0x12000, scoped, tag = 'internal scratch']
  %s0 = inlined_call_operand.vmem [shape: f32[16,32], index: 0, kind: input, shape index: {}]
  %s1 = inlined_call_operand.vmem [shape: f32[1,32], index: 1, kind: input, shape index: {}]
  %s2 = inlined_call_operand.vmem [shape: f32[1,32], index: 2, kind: input, shape index: {}]
  %s3 = inlined_call_operand.vmem [shape: f32[32,96], index: 3, kind: input, shape index: {}]
  %s4 = inlined_call_operand.vmem [shape: f32[1,96], index: 4, kind: input, shape index: {}]
  %s5 = inlined_call_operand.vmem [shape: f32[16,96], index: 5, kind: output, shape index: {}]
  %s6 = sld [smem:[#allocation0]]
  $region30: #{encoder_forward.7} parent=0
    _
  %s8 = ssub.s32 1, %s6
  %s9 = scalar_select 0, %s8, %s6
  // Predicated region
  $region2: #{encoder_forward.7} parent=0 // pred_check
    _
  $region3: #{encoder_forward.7} parent=0 // pred_check_branch
    %11 = sbr.rel (0) target = $region5
  $region4: #{encoder_forward.7} parent=0 // pred_region
    _
  $region5: #{encoder_forward.7} parent=0 // pred_fallthru
    _
  // Predicated region
  $region6: #{encoder_forward.7} parent=0 // pred_check
    _
  $region7: #{encoder_forward.7} parent=0 // pred_check_branch
    %13 = sbr.rel (0) target = $region9
  $region8: #{encoder_forward.7} parent=0 // pred_region
    _
  $region9: #{encoder_forward.7} parent=0 // pred_fallthru
    _
  // Predicated region
  $region10: #{encoder_forward.7} parent=0 // pred_check
    _
  $region11: #{encoder_forward.7} parent=0 // pred_check_branch
    %15 = sbr.rel (0) target = $region13
  $region12: #{encoder_forward.7} parent=0 // pred_region
    _
  $region13: #{encoder_forward.7} parent=0 // pred_fallthru
    _
  // Predicated region
  $region14: #{encoder_forward.7} parent=0 // pred_check
    _
  $region15: #{encoder_forward.7} parent=0 // pred_check_branch
    %17 = sbr.rel (0) target = $region17
  $region16: #{encoder_forward.7} parent=0 // pred_region
    _
  $region17: #{encoder_forward.7} parent=0 // pred_fallthru
    _
  // Predicated region
  $region18: #{encoder_forward.7} parent=0 // pred_check
    _
  $region19: #{encoder_forward.7} parent=0 // pred_check_branch
    %19 = sbr.rel (0) target = $region21
  $region20: #{encoder_forward.7} parent=0 // pred_region
    _
  $region21: #{encoder_forward.7} parent=0 // pred_fallthru
    _
  %v20 = vld [vmem:[%s0] sm:$0xff]
  %v21 = vld [vmem:[%s0 + $0x8] sm:$0xff]
  %v22 = vld [vmem:[%s1] sm:$0x1]
  %v23 = vld [vmem:[%s2] sm:$0x1]
  %vm24 = vcmask 261120
  %v25 = vsel %vm24, %v20, 0.0
  %26 = vadd.xlane.f32.xlu0 %v25
  %v27 = vpop.xlane.xlu0 %26
  %v28 = vsel %vm24, %v21, 0.0
  %29 = vadd.xlane.f32.xlu0 %v28
  %v30 = vpop.xlane.xlu0 %29
  %v31 = vrcp.pop 32.0
  %v32 = vmul.f32 %v27, %v31
  %v33 = vmul.f32 %v30, %v31
  %v34 = vsub.f32 %v20, %v32
  %v35 = vsub.f32 %v21, %v33
  %v36 = vmul.f32 %v34, %v34
  %v37 = vmul.f32 %v35, %v35
  %v38 = vsel %vm24, %v36, 0.0
  %39 = vadd.xlane.f32.xlu0 %v38
  %v40 = vpop.xlane.xlu0 %39
  %v41 = vsel %vm24, %v37, 0.0
  %42 = vadd.xlane.f32.xlu0 %v41
  %v43 = vpop.xlane.xlu0 %42
  %v44 = vrcp.pop 31.0
  %v45 = vmul.f32 %v40, %v44
  %v46 = vmul.f32 %v43, %v44
  %v47 = vadd.f32 %v45, 1e-06
  %v48 = vadd.f32 %v46, 1e-06
  %v49 = vrsqrt.pop %v47
  %v50 = vrsqrt.pop %v48
  %v51 = vmul.f32 %v34, %v49
  %v52 = vmul.f32 %v35, %v50
  %v54 = vlaneseq
  %v55 = vshrl.u32 %v54, 7
  %v56 = vsub.s32 0, %v55
  %v57 = vrot.slane %v22, %v56
  %v59 = vmul.f32 %v57, %v51
  %v60 = vmul.f32 %v57, %v52
  %v62 = vlaneseq
  %v63 = vshrl.u32 %v62, 7
  %v64 = vsub.s32 0, %v63
  %v65 = vrot.slane %v23, %v64
  %v67 = vadd.f32 %v59, %v65
  %v68 = vadd.f32 %v60, %v65
  %v69 = vld [vmem:[%s3] sm:$0xff]
  %v70 = vld [vmem:[%s3 + $0x8] sm:$0xff]
  %v71 = vld [vmem:[%s3 + $0x10] sm:$0xff]
  %v72 = vld [vmem:[%s3 + $0x18] sm:$0xff]
  %v73 = vld [vmem:[%s4] sm:$0x1]
  %v75 = vlaneseq
  %v76 = vshrl.u32 %v75, 7
  %v77 = vsub.s32 0, %v76
  %v78 = vrot.slane %v73, %v77
  %v81 = vsel %vm24, %v67, 0
  %v84 = vsel %vm24, %v68, 0
  %86 = vmatprep.subr.mxu0 0.0
  %87 = vmatpush1.msra.mxu0 %v69
  %88 = vmatprep.subr.mxu0 0.0
  %89 = vmatpush1.msra.mxu0 %v70
  %90 = vmatprep.subr.mxu0 0.0
  %91 = vmatpush1.msra.mxu0 %v71
  %92 = vmatprep.subr.mxu0 0.0
  %93 = vmatpush1.msra.mxu0 %v72
  %94 = vmatprep.subr.mxu0 0.0
  %95 = vmatpush1.msra.mxu0 0.0
  %96 = vmatprep.subr.mxu0 0.0
  %97 = vmatpush1.msra.mxu0 0.0
  %98 = vmatprep.subr.mxu0 0.0
  %99 = vmatpush1.msra.mxu0 0.0
  %100 = vmatprep.subr.mxu0 0.0
  %101 = vmatpush1.msra.mxu0 0.0
  %102 = vmatprep.subr.mxu0 0.0
  %103 = vmatpush1.msra.mxu0 0.0
  %104 = vmatprep.subr.mxu0 0.0
  %105 = vmatpush1.msra.mxu0 0.0
  %106 = vmatprep.subr.mxu0 0.0
  %107 = vmatpush1.msra.mxu0 0.0
  %108 = vmatprep.subr.mxu0 0.0
  %109 = vmatpush1.msra.mxu0 0.0
  %110 = vmatprep.subr.mxu0 0.0
  %111 = vmatpush1.msra.mxu0 0.0
  %112 = vmatprep.subr.mxu0 0.0
  %113 = vmatpush1.msra.mxu0 0.0
  %114 = vmatprep.subr.mxu0 0.0
  %115 = vmatpush1.msra.mxu0 0.0
  %116 = vmatprep.subr.mxu0 0.0
  %117 = vmatpush1.msra.mxu0 0.0
  %118 = vmatprep.subr.mxu0 0.0
  %119 = vmatpush1.msra.mxu0 0.0
  %120 = vmatprep.subr.mxu0 0.0
  %121 = vmatpush1.msra.mxu0 0.0
  %122 = vmatprep.subr.mxu0 0.0
  %123 = vmatpush1.msra.mxu0 0.0
  %124 = vmatprep.subr.mxu0 0.0
  %125 = vmatpush1.msra.mxu0 0.0
  %126 = vmatprep.subr.mxu0 0.0
  %127 = vmatpush1.msra.mxu0 0.0
  %128 = vmatprep.subr.mxu0 0.0
  %129 = vmatpush1.msra.mxu0 0.0
  %130 = vmatprep.subr.mxu0 0.0
  %131 = vmatpush1.msra.mxu0 0.0
  %132 = vmatprep.subr.mxu0 0.0
  %133 = vmatpush1.msra.mxu0 0.0
  %134 = vmatprep.subr.mxu0 0.0
  %135 = vmatpush1.msra.mxu0 0.0
  %136 = vmatprep.subr.mxu0 0.0
  %137 = vmatpush1.msra.mxu0 0.0
  %138 = vmatprep.subr.mxu0 0.0
  %139 = vmatpush1.msra.mxu0 0.0
  %140 = vmatprep.subr.mxu0 0.0
  %141 = vmatpush1.msra.mxu0 0.0
  %142 = vmatprep.subr.mxu0 0.0
  %143 = vmatpush1.msra.mxu0 0.0
  %144 = vmatprep.subr.mxu0 0.0
  %145 = vmatpush1.msra.mxu0 0.0
  %146 = vmatprep.subr.mxu0 0.0
  %147 = vmatpush1.msra.mxu0 0.0
  %148 = vmatprep.subr.mxu0 0.0
  %149 = vmatpush1.msra.mxu0 0.0
  %150 = vmatprep.mubr.f32.mxu0 0.0
  %151 = vmatmul.mubr.f32.gmra.mrb[0].mxu0 %v81
  %v152 = vpop.f32.mrb[0].mxu0
  %v153 = vadd.f32 %v78, %v152
  %v154 = vpop.f32.mrb[0].mxu0
  %155 = vmatprep.mubr.f32.mxu0 0.0
  %156 = vmatmul.mubr.f32.gmra.mrb[0].mxu0 %v84
  %v157 = vpop.f32.mrb[0].mxu0
  %v158 = vadd.f32 %v78, %v157
  %v159 = vpop.f32.mrb[0].mxu0
  %160 = vdwg.mxu0
  %vm161 = vcmask 785408
  %162 = vst.msk [vmem:[%s5] sm:$0xff] %vm161, %v153
  %163 = vst.msk [vmem:[%s5 + $0x8] sm:$0xff] %vm161, %v158
  // Predicated region
  $region22: #{encoder_forward.7} parent=0 // pred_check
    _
  $region23: #{encoder_forward.7} parent=0 // pred_check_branch
    %165 = sbr.rel (0) target = $region25
  $region24: #{encoder_forward.7} parent=0 // pred_region
    _
  $region25: #{encoder_forward.7} parent=0 // pred_fallthru
    _
  // Predicated region
  $region26: #{encoder_forward.7} parent=0 // pred_check
    _
  $region27: #{encoder_forward.7} parent=0 // pred_check_branch
    %167 = sbr.rel (0) target = $region29
  $region28: #{encoder_forward.7} parent=0 // pred_region
    _
  $region29: #{encoder_forward.7} parent=0 // pred_fallthru
    _

// kernel: encoder_forward.9
$region0: #{encoder_forward.9}
  #allocation0 [shape = 'u32[]', space=smem, size = 0x4, offset = 0x4, fixed_abs, tag = 'smem constant byte address 0x4 - core index']
  #allocation1 [shape = 'u32[144,128]{1,0:T(1,128)}', space=vmem, size = 0x12000, scoped, tag = 'internal scratch']
  %s0 = inlined_call_operand.vmem [shape: f32[16,32], index: 0, kind: input, shape index: {}]
  %s1 = inlined_call_operand.vmem [shape: f32[1,32], index: 1, kind: input, shape index: {}]
  %s2 = inlined_call_operand.vmem [shape: f32[1,32], index: 2, kind: input, shape index: {}]
  %s3 = inlined_call_operand.vmem [shape: f32[32,64], index: 3, kind: input, shape index: {}]
  %s4 = inlined_call_operand.vmem [shape: f32[1,64], index: 4, kind: input, shape index: {}]
  %s5 = inlined_call_operand.vmem [shape: f32[64,32], index: 5, kind: input, shape index: {}]
  %s6 = inlined_call_operand.vmem [shape: f32[1,32], index: 6, kind: input, shape index: {}]
  %s7 = inlined_call_operand.vmem [shape: f32[16,32], index: 7, kind: output, shape index: {}]
  %s8 = sld [smem:[#allocation0]]
  $region38: #{encoder_forward.9} parent=0
    _
  %s10 = ssub.s32 1, %s8
  %s11 = scalar_select 0, %s10, %s8
  // Predicated region
  $region2: #{encoder_forward.9} parent=0 // pred_check
    _
  $region3: #{encoder_forward.9} parent=0 // pred_check_branch
    %13 = sbr.rel (0) target = $region5
  $region4: #{encoder_forward.9} parent=0 // pred_region
    _
  $region5: #{encoder_forward.9} parent=0 // pred_fallthru
    _
  // Predicated region
  $region6: #{encoder_forward.9} parent=0 // pred_check
    _
  $region7: #{encoder_forward.9} parent=0 // pred_check_branch
    %15 = sbr.rel (0) target = $region9
  $region8: #{encoder_forward.9} parent=0 // pred_region
    _
  $region9: #{encoder_forward.9} parent=0 // pred_fallthru
    _
  // Predicated region
  $region10: #{encoder_forward.9} parent=0 // pred_check
    _
  $region11: #{encoder_forward.9} parent=0 // pred_check_branch
    %17 = sbr.rel (0) target = $region13
  $region12: #{encoder_forward.9} parent=0 // pred_region
    _
  $region13: #{encoder_forward.9} parent=0 // pred_fallthru
    _
  // Predicated region
  $region14: #{encoder_forward.9} parent=0 // pred_check
    _
  $region15: #{encoder_forward.9} parent=0 // pred_check_branch
    %19 = sbr.rel (0) target = $region17
  $region16: #{encoder_forward.9} parent=0 // pred_region
    _
  $region17: #{encoder_forward.9} parent=0 // pred_fallthru
    _
  // Predicated region
  $region18: #{encoder_forward.9} parent=0 // pred_check
    _
  $region19: #{encoder_forward.9} parent=0 // pred_check_branch
    %21 = sbr.rel (0) target = $region21
  $region20: #{encoder_forward.9} parent=0 // pred_region
    _
  $region21: #{encoder_forward.9} parent=0 // pred_fallthru
    _
  // Predicated region
  $region22: #{encoder_forward.9} parent=0 // pred_check
    _
  $region23: #{encoder_forward.9} parent=0 // pred_check_branch
    %23 = sbr.rel (0) target = $region25
  $region24: #{encoder_forward.9} parent=0 // pred_region
    _
  $region25: #{encoder_forward.9} parent=0 // pred_fallthru
    _
  // Predicated region
  $region26: #{encoder_forward.9} parent=0 // pred_check
    _
  $region27: #{encoder_forward.9} parent=0 // pred_check_branch
    %25 = sbr.rel (0) target = $region29
  $region28: #{encoder_forward.9} parent=0 // pred_region
    _
  $region29: #{encoder_forward.9} parent=0 // pred_fallthru
    _
  %v26 = vld [vmem:[%s0] sm:$0xff]
  %v27 = vld [vmem:[%s0 + $0x8] sm:$0xff]
  %v28 = vld [vmem:[%s1] sm:$0x1]
  %v29 = vld [vmem:[%s2] sm:$0x1]
  %vm30 = vcmask 261120
  %v31 = vsel %vm30, %v26, 0.0
  %32 = vadd.xlane.f32.xlu0 %v31
  %v33 = vpop.xlane.xlu0 %32
  %v34 = vsel %vm30, %v27, 0.0
  %35 = vadd.xlane.f32.xlu0 %v34
  %v36 = vpop.xlane.xlu0 %35
  %v37 = vrcp.pop 32.0
  %v38 = vmul.f32 %v33, %v37
  %v39 = vmul.f32 %v36, %v37
  %v40 = vsub.f32 %v26, %v38
  %v41 = vsub.f32 %v27, %v39
  %v42 = vmul.f32 %v40, %v40
  %v43 = vmul.f32 %v41, %v41
  %v44 = vsel %vm30, %v42, 0.0
  %45 = vadd.xlane.f32.xlu0 %v44
  %v46 = vpop.xlane.xlu0 %45
  %v47 = vsel %vm30, %v43, 0.0
  %48 = vadd.xlane.f32.xlu0 %v47
  %v49 = vpop.xlane.xlu0 %48
  %v50 = vrcp.pop 31.0
  %v51 = vmul.f32 %v46, %v50
  %v52 = vmul.f32 %v49, %v50
  %v53 = vadd.f32 %v51, 1e-06
  %v54 = vadd.f32 %v52, 1e-06
  %v55 = vrsqrt.pop %v53
  %v56 = vrsqrt.pop %v54
  %v57 = vmul.f32 %v40, %v55
  %v58 = vmul.f32 %v41, %v56
  %v60 = vlaneseq
  %v61 = vshrl.u32 %v60, 7
  %v62 = vsub.s32 0, %v61
  %v63 = vrot.slane %v28, %v62
  %v65 = vmul.f32 %v63, %v57
  %v66 = vmul.f32 %v63, %v58
  %v68 = vlaneseq
  %v69 = vshrl.u32 %v68, 7
  %v70 = vsub.s32 0, %v69
  %v71 = vrot.slane %v29, %v70
  %v73 = vadd.f32 %v65, %v71
  %v74 = vadd.f32 %v66, %v71
  %v75 = vld [vmem:[%s3] sm:$0xff]
  %v76 = vld [vmem:[%s3 + $0x8] sm:$0xff]
  %v77 = vld [vmem:[%s3 + $0x10] sm:$0xff]
  %v78 = vld [vmem:[%s3 + $0x18] sm:$0xff]
  %v79 = vld [vmem:[%s4] sm:$0x1]
  %v81 = vlaneseq
  %v82 = vshrl.u32 %v81, 7
  %v83 = vsub.s32 0, %v82
  %v84 = vrot.slane %v79, %v83
  %v87 = vsel %vm30, %v73, 0
  %v90 = vsel %vm30, %v74, 0
  %92 = vmatprep.subr.mxu0 0.0
  %93 = vmatpush1.msra.mxu0 %v75
  %94 = vmatprep.subr.mxu0 0.0
  %95 = vmatpush1.msra.mxu0 %v76
  %96 = vmatprep.subr.mxu0 0.0
  %97 = vmatpush1.msra.mxu0 %v77
  %98 = vmatprep.subr.mxu0 0.0
  %99 = vmatpush1.msra.mxu0 %v78
  %100 = vmatprep.subr.mxu0 0.0
  %101 = vmatpush1.msra.mxu0 0.0
  %102 = vmatprep.subr.mxu0 0.0
  %103 = vmatpush1.msra.mxu0 0.0
  %104 = vmatprep.subr.mxu0 0.0
  %105 = vmatpush1.msra.mxu0 0.0
  %106 = vmatprep.subr.mxu0 0.0
  %107 = vmatpush1.msra.mxu0 0.0
  %108 = vmatprep.subr.mxu0 0.0
  %109 = vmatpush1.msra.mxu0 0.0
  %110 = vmatprep.subr.mxu0 0.0
  %111 = vmatpush1.msra.mxu0 0.0
  %112 = vmatprep.subr.mxu0 0.0
  %113 = vmatpush1.msra.mxu0 0.0
  %114 = vmatprep.subr.mxu0 0.0
  %115 = vmatpush1.msra.mxu0 0.0
  %116 = vmatprep.subr.mxu0 0.0
  %117 = vmatpush1.msra.mxu0 0.0
  %118 = vmatprep.subr.mxu0 0.0
  %119 = vmatpush1.msra.mxu0 0.0
  %120 = vmatprep.subr.mxu0 0.0
  %121 = vmatpush1.msra.mxu0 0.0
  %122 = vmatprep.subr.mxu0 0.0
  %123 = vmatpush1.msra.mxu0 0.0
  %124 = vmatprep.subr.mxu0 0.0
  %125 = vmatpush1.msra.mxu0 0.0
  %126 = vmatprep.subr.mxu0 0.0
  %127 = vmatpush1.msra.mxu0 0.0
  %128 = vmatprep.subr.mxu0 0.0
  %129 = vmatpush1.msra.mxu0 0.0
  %130 = vmatprep.subr.mxu0 0.0
  %131 = vmatpush1.msra.mxu0 0.0
  %132 = vmatprep.subr.mxu0 0.0
  %133 = vmatpush1.msra.mxu0 0.0
  %134 = vmatprep.subr.mxu0 0.0
  %135 = vmatpush1.msra.mxu0 0.0
  %136 = vmatprep.subr.mxu0 0.0
  %137 = vmatpush1.msra.mxu0 0.0
  %138 = vmatprep.subr.mxu0 0.0
  %139 = vmatpush1.msra.mxu0 0.0
  %140 = vmatprep.subr.mxu0 0.0
  %141 = vmatpush1.msra.mxu0 0.0
  %142 = vmatprep.subr.mxu0 0.0
  %143 = vmatpush1.msra.mxu0 0.0
  %144 = vmatprep.subr.mxu0 0.0
  %145 = vmatpush1.msra.mxu0 0.0
  %146 = vmatprep.subr.mxu0 0.0
  %147 = vmatpush1.msra.mxu0 0.0
  %148 = vmatprep.subr.mxu0 0.0
  %149 = vmatpush1.msra.mxu0 0.0
  %150 = vmatprep.subr.mxu0 0.0
  %151 = vmatpush1.msra.mxu0 0.0
  %152 = vmatprep.subr.mxu0 0.0
  %153 = vmatpush1.msra.mxu0 0.0
  %154 = vmatprep.subr.mxu0 0.0
  %155 = vmatpush1.msra.mxu0 0.0
  %156 = vmatprep.mubr.f32.mxu0 0.0
  %157 = vmatmul.mubr.f32.gmra.mrb[0].mxu0 %v87
  %v158 = vpop.f32.mrb[0].mxu0
  %v159 = vadd.f32 %v84, %v158
  %v160 = vpop.f32.mrb[0].mxu0
  %161 = vmatprep.mubr.f32.mxu0 0.0
  %162 = vmatmul.mubr.f32.gmra.mrb[0].mxu0 %v90
  %v163 = vpop.f32.mrb[0].mxu0
  %v164 = vadd.f32 %v84, %v163
  %v165 = vpop.f32.mrb[0].mxu0
  %166 = vdwg.mxu0
  %v167 = vmax.f32 %v159, 0.0
  %v168 = vmax.f32 %v164, 0.0
  %v169 = vld [vmem:[%s5] sm:$0xff]
  %v170 = vld [vmem:[%s5 + $0x8] sm:$0xff]
  %v171 = vld [vmem:[%s5 + $0x10] sm:$0xff]
  %v172 = vld [vmem:[%s5 + $0x18] sm:$0xff]
  %v173 = vld [vmem:[%s5 + $0x20] sm:$0xff]
  %v174 = vld [vmem:[%s5 + $0x28] sm:$0xff]
  %v175 = vld [vmem:[%s5 + $0x30] sm:$0xff]
  %v176 = vld [vmem:[%s5 + $0x38] sm:$0xff]
  %v177 = vld [vmem:[%s6] sm:$0x1]
  %v179 = vlaneseq
  %v180 = vshrl.u32 %v179, 7
  %v181 = vsub.s32 0, %v180
  %v182 = vrot.slane %v177, %v181
  %vm184 = vcmask 523264
  %v186 = vsel %vm184, %v167, 0
  %v189 = vsel %vm184, %v168, 0
  %191 = vmatprep.subr.mxu0 0.0
  %192 = vmatpush1.msra.mxu0 %v169
  %193 = vmatprep.subr.mxu0 0.0
  %194 = vmatpush1.msra.mxu0 %v170
  %195 = vmatprep.subr.mxu0 0.0
  %196 = vmatpush1.msra.mxu0 %v171
  %197 = vmatprep.subr.mxu0 0.0
  %198 = vmatpush1.msra.mxu0 %v172
  %199 = vmatprep.subr.mxu0 0.0
  %200 = vmatpush1.msra.mxu0 %v173
  %201 = vmatprep.subr.mxu0 0.0
  %202 = vmatpush1.msra.mxu0 %v174
  %203 = vmatprep.subr.mxu0 0.0
  %204 = vmatpush1.msra.mxu0 %v175
  %205 = vmatprep.subr.mxu0 0.0
  %206 = vmatpush1.msra.mxu0 %v176
  %207 = vmatprep.subr.mxu0 0.0
  %208 = vmatpush1.msra.mxu0 0.0
  %209 = vmatprep.subr.mxu0 0.0
  %210 = vmatpush1.msra.mxu0 0.0
  %211 = vmatprep.subr.mxu0 0.0
  %212 = vmatpush1.msra.mxu0 0.0
  %213 = vmatprep.subr.mxu0 0.0
  %214 = vmatpush1.msra.mxu0 0.0
  %215 = vmatprep.subr.mxu0 0.0
  %216 = vmatpush1.msra.mxu0 0.0
  %217 = vmatprep.subr.mxu0 0.0
  %218 = vmatpush1.msra.mxu0 0.0
  %219 = vmatprep.subr.mxu0 0.0
  %220 = vmatpush1.msra.mxu0 0.0
  %221 = vmatprep.subr.mxu0 0.0
  %222 = vmatpush1.msra.mxu0 0.0
  %223 = vmatprep.subr.mxu0 0.0
  %224 = vmatpush1.msra.mxu0 0.0
  %225 = vmatprep.subr.mxu0 0.0
  %226 = vmatpush1.msra.mxu0 0.0
  %227 = vmatprep.subr.mxu0 0.0
  %228 = vmatpush1.msra.mxu0 0.0
  %229 = vmatprep.subr.mxu0 0.0
  %230 = vmatpush1.msra.mxu0 0.0
  %231 = vmatprep.subr.mxu0 0.0
  %232 = vmatpush1.msra.mxu0 0.0
  %233 = vmatprep.subr.mxu0 0.0
  %234 = vmatpush1.msra.mxu0 0.0
  %235 = vmatprep.subr.mxu0 0.0
  %236 = vmatpush1.msra.mxu0 0.0
  %237 = vmatprep.subr.mxu0 0.0
  %238 = vmatpush1.msra.mxu0 0.0
  %239 = vmatprep.subr.mxu0 0.0
  %240 = vmatpush1.msra.mxu0 0.0
  %241 = vmatprep.subr.mxu0 0.0
  %242 = vmatpush1.msra.mxu0 0.0
  %243 = vmatprep.subr.mxu0 0.0
  %244 = vmatpush1.msra.mxu0 0.0
  %245 = vmatprep.subr.mxu0 0.0
  %246 = vmatpush1.msra.mxu0 0.0
  %247 = vmatprep.subr.mxu0 0.0
  %248 = vmatpush1.msra.mxu0 0.0
  %249 = vmatprep.subr.mxu0 0.0
  %250 = vmatpush1.msra.mxu0 0.0
  %251 = vmatprep.subr.mxu0 0.0
  %252 = vmatpush1.msra.mxu0 0.0
  %253 = vmatprep.subr.mxu0 0.0
  %254 = vmatpush1.msra.mxu0 0.0
  %255 = vmatprep.mubr.f32.mxu0 0.0
  %256 = vmatmul.mubr.f32.gmra.mrb[0].mxu0 %v186
  %v257 = vpop.f32.mrb[0].mxu0
  %v258 = vadd.f32 %v182, %v257
  %v259 = vpop.f32.mrb[0].mxu0
  %260 = vmatprep.mubr.f32.mxu0 0.0
  %261 = vmatmul.mubr.f32.gmra.mrb[0].mxu0 %v189
  %v262 = vpop.f32.mrb[0].mxu0
  %v263 = vadd.f32 %v182, %v262
  %v264 = vpop.f32.mrb[0].mxu0
  %265 = vdwg.mxu0
  %v266 = vadd.f32 %v26, %v258
  %v267 = vadd.f32 %v27, %v263
  %268 = vst.msk [vmem:[%s7] sm:$0xff] %vm30, %v266
  %269 = vst.msk [vmem:[%s7 + $0x8] sm:$0xff] %vm30, %v267
  // Predicated region
  $region30: #{encoder_forward.9} parent=0 // pred_check
    _
  $region31: #{encoder_forward.9} parent=0 // pred_check_branch
    %271 = sbr.rel (0) target = $region33
  $region32: #{encoder_forward.9} parent=0 // pred_region
    _
  $region33: #{encoder_forward.9} parent=0 // pred_fallthru
    _
  // Predicated region
  $region34: #{encoder_forward.9} parent=0 // pred_check
    _
  $region35: #{encoder_forward.9} parent=0 // pred_check_branch
    %273 = sbr.rel (0) target = $region37
  $region36: #{encoder_forward.9} parent=0 // pred_region
    _
  $region37: #{encoder_forward.9} parent=0 // pred_fallthru
    _

// kernel: encoder_forward.13
$region0: #{encoder_forward.13}
  #allocation0 [shape = 'u32[]', space=smem, size = 0x4, offset = 0x4, fixed_abs, tag = 'smem constant byte address 0x4 - core index']
  #allocation1 [shape = 'u32[144,128]{1,0:T(1,128)}', space=vmem, size = 0x12000, scoped, tag = 'internal scratch']
  %s0 = inlined_call_operand.vmem [shape: f32[16,32], index: 0, kind: input, shape index: {}]
  %s1 = inlined_call_operand.vmem [shape: f32[1,32], index: 1, kind: input, shape index: {}]
  %s2 = inlined_call_operand.vmem [shape: f32[1,32], index: 2, kind: input, shape index: {}]
  %s3 = inlined_call_operand.hbm [shape: f32[16,32], index: 3, kind: output, shape index: {}]
  %s4 = sld [smem:[#allocation0]]
  $region22: #{encoder_forward.13} parent=0
    _
  %s6 = ssub.s32 1, %s4
  %s7 = scalar_select 0, %s6, %s4
  $region1: #{encoder_forward.13} parent=0
    #allocation2 [shape = 'u8[8192]{0}', space=vmem, size = 0x2000, scoped, tag = 'output window, operand 0, single buffered']
    #allocation3 [shape = 's32[1]{0}', space=sflag, size = 0x4, scoped, tag = 'scoped memory for encoder_forward.13']
    %8 = vsyncpa [#allocation3], 0
    // Predicated region
    $region2: #{encoder_forward.13} parent=1 // pred_check
      _
    $region3: #{encoder_forward.13} parent=1 // pred_check_branch
      %10 = sbr.rel (0) target = $region5
    $region4: #{encoder_forward.13} parent=1 // pred_region
      _
    $region5: #{encoder_forward.13} parent=1 // pred_fallthru
      _
    // Predicated region
    $region6: #{encoder_forward.13} parent=1 // pred_check
      _
    $region7: #{encoder_forward.13} parent=1 // pred_check_branch
      %12 = sbr.rel (0) target = $region9
    $region8: #{encoder_forward.13} parent=1 // pred_region
      _
    $region9: #{encoder_forward.13} parent=1 // pred_fallthru
      _
    // Predicated region
    $region10: #{encoder_forward.13} parent=1 // pred_check
      _
    $region11: #{encoder_forward.13} parent=1 // pred_check_branch
      %14 = sbr.rel (0) target = $region13
    $region12: #{encoder_forward.13} parent=1 // pred_region
      _
    $region13: #{encoder_forward.13} parent=1 // pred_fallthru
      _
    %v15 = vld [vmem:[%s0] sm:$0xff]
    %v16 = vld [vmem:[%s0 + $0x8] sm:$0xff]
    %v17 = vld [vmem:[%s1] sm:$0x1]
    %v18 = vld [vmem:[%s2] sm:$0x1]
    %vm19 = vcmask 261120
    %v20 = vsel %vm19, %v15, 0.0
    %21 = vadd.xlane.f32.xlu0 %v20
    %v22 = vpop.xlane.xlu0 %21
    %v23 = vsel %vm19, %v16, 0.0
    %24 = vadd.xlane.f32.xlu0 %v23
    %v25 = vpop.xlane.xlu0 %24
    %v26 = vrcp.pop 32.0
    %v27 = vmul.f32 %v22, %v26
    %v28 = vmul.f32 %v25, %v26
    %v29 = vsub.f32 %v15, %v27
    %v30 = vsub.f32 %v16, %v28
    %v31 = vmul.f32 %v29, %v29
    %v32 = vmul.f32 %v30, %v30
    %v33 = vsel %vm19, %v31, 0.0
    %34 = vadd.xlane.f32.xlu0 %v33
    %v35 = vpop.xlane.xlu0 %34
    %v36 = vsel %vm19, %v32, 0.0
    %37 = vadd.xlane.f32.xlu0 %v36
    %v38 = vpop.xlane.xlu0 %37
    %v39 = vrcp.pop 31.0
    %v40 = vmul.f32 %v35, %v39
    %v41 = vmul.f32 %v38, %v39
    %v42 = vadd.f32 %v40, 1e-06
    %v43 = vadd.f32 %v41, 1e-06
    %v44 = vrsqrt.pop %v42
    %v45 = vrsqrt.pop %v43
    %v46 = vmul.f32 %v29, %v44
    %v47 = vmul.f32 %v30, %v45
    %v49 = vlaneseq
    %v50 = vshrl.u32 %v49, 7
    %v51 = vsub.s32 0, %v50
    %v52 = vrot.slane %v17, %v51
    %v54 = vmul.f32 %v52, %v46
    %v55 = vmul.f32 %v52, %v47
    %v57 = vlaneseq
    %v58 = vshrl.u32 %v57, 7
    %v59 = vsub.s32 0, %v58
    %v60 = vrot.slane %v18, %v59
    %v62 = vadd.f32 %v54, %v60
    %v63 = vadd.f32 %v55, %v60
    %64 = vst.msk [vmem:[#allocation2] sm:$0xff] %vm19, %v62
    %65 = vst.msk [vmem:[#allocation2 + $0x8] sm:$0xff] %vm19, %v63
    // Predicated region
    $region14: #{encoder_forward.13} parent=1 // pred_check
      _
    $region15: #{encoder_forward.13} parent=1 // pred_check_branch
      %67 = sbr.rel (0) target = $region17
    $region16: #{encoder_forward.13} parent=1 // pred_region
      %s69 = ssub.s32 256, 256
      %70 = vsyncadd [#allocation3], %s69
      %s71 = sshll.u32 [#allocation2], 4
      %s72 = int_to_ptr.vmem [resolvable:$true] %s71
      %77 = dma.vmem_to_hbm [thread:$0]  %s72, 256, %s3, [#allocation3], 128, 128, 8
    $region17: #{encoder_forward.13} parent=1 // pred_fallthru
      _
    // Predicated region
    $region18: #{encoder_forward.13} parent=1 // pred_check
      _
    $region19: #{encoder_forward.13} parent=1 // pred_check_branch
      %79 = sbr.rel (0) target = $region21
    $region20: #{encoder_forward.13} parent=1 // pred_region
      %80 = dma.done [#allocation3], 256
    $region21: #{encoder_forward.13} parent=1 // pred_fallthru
      _
    %81 = vsyncpa [#allocation3], 1

// kernel: encoder_forward.8
$region0: #{encoder_forward.8}
  #allocation0 [shape = 'u32[]', space=smem, size = 0x4, offset = 0x4, fixed_abs, tag = 'smem constant byte address 0x4 - core index']
  #allocation1 [shape = 'u32[144,128]{1,0:T(1,128)}', space=vmem, size = 0x12000, scoped, tag = 'internal scratch']
  %s0 = inlined_call_operand.vmem [shape: f32[2,8,3,32], index: 0, kind: input, shape index: {}]
  %s1 = inlined_call_operand.vmem [shape: f32[2,1,8], index: 1, kind: input, shape index: {}]
  %s2 = inlined_call_operand.vmem [shape: f32[32,32], index: 2, kind: input, shape index: {}]
  %s3 = inlined_call_operand.vmem [shape: f32[1,32], index: 3, kind: input, shape index: {}]
  %s4 = inlined_call_operand.vmem [shape: f32[2,8,32], index: 4, kind: input, shape index: {}]
  %s5 = inlined_call_operand.vmem [shape: f32[2,8,32], index: 5, kind: output, shape index: {}]
  %s6 = sld [smem:[#allocation0]]
  $region53: #{encoder_forward.8} parent=0
    _
  %s8 = ssub.s32 1, %s6
  %s9 = scalar_select 0, %s8, %s6
  loop: start=0, step=1, limit=4
  $region2: #{encoder_forward.8} parent=0 // loop_pre_header
    _
  $region3: #{encoder_forward.8} parent=0 // loop_header
    %s11 = sphi 0, %s15
    %p12 = scmp.ge.s32.totalorder %s11, 4
    %s21 = sphi 0, %s23
    %s24 = sphi 0, %s21
    %s25 = sphi 0, %s24
    %s41 = sphi 0, %s25
    %s47 = sphi 0, %s49
    %s50 = sphi 0, %s47
    %s51 = sphi 0, %s50
    %s67 = sphi 0, %s51
    %s71 = sphi 0, %s71
    %s73 = sphi 0, %s71
    %s74 = sphi 0, %s73
    %s88 = sphi 0, %s74
    %s92 = sphi 0, %s92
    %s94 = sphi 0, %s92
    %s95 = sphi 0, %s94
    %s109 = sphi 0, %s95
    %s115 = sphi 0, %s117
    %s118 = sphi 0, %s115
    %s119 = sphi 0, %s118
    %s135 = sphi 0, %s119
    %s141 = sphi 0, %s143
    %s144 = sphi 0, %s141
    %s145 = sphi 0, %s144
    %s161 = sphi 0, %s145
  $region4: #{encoder_forward.8} parent=0 // loop_header_branch
    %14 = sbr.rel (%p12) target = $region8
  $region5: #{encoder_forward.8} parent=0 // loop_body
    %s16 = ssub.s32 %s11, 1
    %s17 = ssub.s32 %s11, 2
    %s18 = sadd.s32 %s11, 1
    %s19 = ssub.s32 %s11, %s18
    %p20 = scmp.eq.s32.totalorder %s19, 0
    %s22 = sadd.s32 %s21, 1
    %s23 = scalar_select %p20, %s21, %s22
    %p26 = pneg %p20
    %p27 = scmp.eq.s32.totalorder %s11, 1
    %p28 = por %p26, %p27
    %p29 = scmp.ne.s32.totalorder %s21, %s24
    %p30 = scmp.eq.s32.totalorder %s11, 0
    %p31 = por %p29, %p30
    %p32 = scmp.ne.s32.totalorder %s21, %s24
    %p33 = scmp.eq.s32.totalorder %s16, 1
    %p34 = por %p32, %p33
    %p35 = scmp.ne.s32.totalorder %s24, %s25
    %p36 = scmp.eq.s32.totalorder %s16, 0
    %p37 = por %p35, %p36
    %p38 = scmp.ne.s32.totalorder %s24, %s25
    %p39 = scmp.eq.s32.totalorder %s17, 1
    %p40 = por %p38, %p39
    %p42 = scmp.ne.s32.totalorder %s25, %s41
    %p43 = scmp.eq.s32.totalorder %s17, 0
    %p44 = por %p42, %p43
    %s45 = ssub.s32 %s11, %s18
    %p46 = scmp.eq.s32.totalorder %s45, 0
    %s48 = sadd.s32 %s47, 1
    %s49 = scalar_select %p46, %s47, %s48
    %p52 = pneg %p46
    %p53 = scmp.eq.s32.totalorder %s11, 1
    %p54 = por %p52, %p53
    %p55 = scmp.ne.s32.totalorder %s47, %s50
    %p56 = scmp.eq.s32.totalorder %s11, 0
    %p57 = por %p55, %p56
    %p58 = scmp.ne.s32.totalorder %s47, %s50
    %p59 = scmp.eq.s32.totalorder %s16, 1
    %p60 = por %p58, %p59
    %p61 = scmp.ne.s32.totalorder %s50, %s51
    %p62 = scmp.eq.s32.totalorder %s16, 0
    %p63 = por %p61, %p62
    %p64 = scmp.ne.s32.totalorder %s50, %s51
    %p65 = scmp.eq.s32.totalorder %s17, 1
    %p66 = por %p64, %p65
    %p68 = scmp.ne.s32.totalorder %s51, %s67
    %p69 = scmp.eq.s32.totalorder %s17, 0
    %p70 = por %p68, %p69
    %s72 = sadd.s32 %s71, 1
    %p75 = scmp.eq.s32.totalorder %s11, 1
    %p76 = scmp.ne.s32.totalorder %s71, %s73
    %p77 = scmp.eq.s32.totalorder %s11, 0
    %p78 = por %p76, %p77
    %p79 = scmp.ne.s32.totalorder %s71, %s73
    %p80 = scmp.eq.s32.totalorder %s16, 1
    %p81 = por %p79, %p80
    %p82 = scmp.ne.s32.totalorder %s73, %s74
    %p83 = scmp.eq.s32.totalorder %s16, 0
    %p84 = por %p82, %p83
    %p85 = scmp.ne.s32.totalorder %s73, %s74
    %p86 = scmp.eq.s32.totalorder %s17, 1
    %p87 = por %p85, %p86
    %p89 = scmp.ne.s32.totalorder %s74, %s88
    %p90 = scmp.eq.s32.totalorder %s17, 0
    %p91 = por %p89, %p90
    %s93 = sadd.s32 %s92, 1
    %p96 = scmp.eq.s32.totalorder %s11, 1
    %p97 = scmp.ne.s32.totalorder %s92, %s94
    %p98 = scmp.eq.s32.totalorder %s11, 0
    %p99 = por %p97, %p98
    %p100 = scmp.ne.s32.totalorder %s92, %s94
    %p101 = scmp.eq.s32.totalorder %s16, 1
    %p102 = por %p100, %p101
    %p103 = scmp.ne.s32.totalorder %s94, %s95
    %p104 = scmp.eq.s32.totalorder %s16, 0
    %p105 = por %p103, %p104
    %p106 = scmp.ne.s32.totalorder %s94, %s95
    %p107 = scmp.eq.s32.totalorder %s17, 1
    %p108 = por %p106, %p107
    %p110 = scmp.ne.s32.totalorder %s95, %s109
    %p111 = scmp.eq.s32.totalorder %s17, 0
    %p112 = por %p110, %p111
    %s113 = ssub.s32 %s11, %s18
    %p114 = scmp.eq.s32.totalorder %s113, 0
    %s116 = sadd.s32 %s115, 1
    %s117 = scalar_select %p114, %s115, %s116
    %p120 = pneg %p114
    %p121 = scmp.eq.s32.totalorder %s11, 1
    %p122 = por %p120, %p121
    %p123 = scmp.ne.s32.totalorder %s115, %s118
    %p124 = scmp.eq.s32.totalorder %s11, 0
    %p125 = por %p123, %p124
    %p126 = scmp.ne.s32.totalorder %s115, %s118
    %p127 = scmp.eq.s32.totalorder %s16, 1
    %p128 = por %p126, %p127
    %p129 = scmp.ne.s32.totalorder %s118, %s119
    %p130 = scmp.eq.s32.totalorder %s16, 0
    %p131 = por %p129, %p130
    %p132 = scmp.ne.s32.totalorder %s118, %s119
    %p133 = scmp.eq.s32.totalorder %s17, 1
    %p134 = por %p132, %p133
    %p136 = scmp.ne.s32.totalorder %s119, %s135
    %p137 = scmp.eq.s32.totalorder %s17, 0
    %p138 = por %p136, %p137
    %s139 = ssub.s32 %s11, %s18
    %p140 = scmp.eq.s32.totalorder %s139, 0
    %s142 = sadd.s32 %s141, 1
    %s143 = scalar_select %p140, %s141, %s142
    %p146 = pneg %p140
    %p147 = scmp.eq.s32.totalorder %s11, 1
    %p148 = por %p146, %p147
    %p149 = scmp.ne.s32.totalorder %s141, %s144
    %p150 = scmp.eq.s32.totalorder %s11, 0
    %p151 = por %p149, %p150
    %p152 = scmp.ne.s32.totalorder %s141, %s144
    %p153 = scmp.eq.s32.totalorder %s16, 1
    %p154 = por %p152, %p153
    %p155 = scmp.ne.s32.totalorder %s144, %s145
    %p156 = scmp.eq.s32.totalorder %s16, 0
    %p157 = por %p155, %p156
    %p158 = scmp.ne.s32.totalorder %s144, %s145
    %p159 = scmp.eq.s32.totalorder %s17, 1
    %p160 = por %p158, %p159
    %p162 = scmp.ne.s32.totalorder %s145, %s161
    %p163 = scmp.eq.s32.totalorder %s17, 0
    %p164 = por %p162, %p163
    %p165 = scmp.le.s32.totalorder 1, %s11
    %p166 = scmp.lt.s32.totalorder %s11, 3
    %p167 = pnand %p165, %p166
    %p168 = pneg %p167
    // Predicated region
    $region9: #{encoder_forward.8} parent=5 // pred_check
      _
    $region10: #{encoder_forward.8} parent=5 // pred_check_branch
      %170 = sbr.rel (%p167) target = $region12
    $region11: #{encoder_forward.8} parent=5 // pred_region
      %s171 = ssub.s32 %s11, 1
      // Predicated region
      $region13: #{encoder_forward.8} parent=11 // pred_check
        %p172 = pneg %p84
      $region14: #{encoder_forward.8} parent=11 // pred_check_branch
        %174 = sbr.rel (%p172) target = $region16
      $region15: #{encoder_forward.8} parent=11 // pred_region
        _
      $region16: #{encoder_forward.8} parent=11 // pred_fallthru
        _
      // Predicated region
      $region17: #{encoder_forward.8} parent=11 // pred_check
        %p175 = pneg %p105
      $region18: #{encoder_forward.8} parent=11 // pred_check_branch
        %177 = sbr.rel (%p175) target = $region20
      $region19: #{encoder_forward.8} parent=11 // pred_region
        _
      $region20: #{encoder_forward.8} parent=11 // pred_fallthru
        _
    $region12: #{encoder_forward.8} parent=5 // pred_fallthru
      _
    %p178 = scmp.lt.s32.totalorder %s11, 2
    // Predicated region
    $region21: #{encoder_forward.8} parent=5 // pred_check
      %p179 = pneg %p178
    $region22: #{encoder_forward.8} parent=5 // pred_check_branch
      %181 = sbr.rel (%p179) target = $region24
    $region23: #{encoder_forward.8} parent=5 // pred_region
      // Predicated region
      $region25: #{encoder_forward.8} parent=23 // pred_check
        %p182 = pneg %p31
      $region26: #{encoder_forward.8} parent=23 // pred_check_branch
        %184 = sbr.rel (%p182) target = $region28
      $region27: #{encoder_forward.8} parent=23 // pred_region
        %p185 = scmp.lt.s32.totalorder %s11, 1
        %s186 = scalar_select %p185, %s11, 1
        %s187 = smul.addr %s186, 8
        %s188 = smul.addr %s187, 4
        %s189 = scalar_lea.vmem %s0, %s188
      $region28: #{encoder_forward.8} parent=23 // pred_fallthru
        _
      // Predicated region
      $region29: #{encoder_forward.8} parent=23 // pred_check
        %p190 = pneg %p57
      $region30: #{encoder_forward.8} parent=23 // pred_check_branch
        %192 = sbr.rel (%p190) target = $region32
      $region31: #{encoder_forward.8} parent=23 // pred_region
        %p193 = scmp.lt.s32.totalorder %s11, 1
        %s194 = scalar_select %p193, %s11, 1
        %s195 = scalar_lea.vmem %s1, %s194
      $region32: #{encoder_forward.8} parent=23 // pred_fallthru
        _
      // Predicated region
      $region33: #{encoder_forward.8} parent=23 // pred_check
        %p196 = pneg %p125
      $region34: #{encoder_forward.8} parent=23 // pred_check_branch
        %198 = sbr.rel (%p196) target = $region36
      $region35: #{encoder_forward.8} parent=23 // pred_region
        %p199 = scmp.lt.s32.totalorder %s11, 1
        %s200 = scalar_select %p199, %s11, 1
        %s201 = smul.addr %s200, 8
        %s202 = scalar_lea.vmem %s4, %s201
      $region36: #{encoder_forward.8} parent=23 // pred_fallthru
        _
    $region24: #{encoder_forward.8} parent=5 // pred_fallthru
      _
    %p203 = scmp.le.s32.totalorder 1, %s11
    %p204 = scmp.lt.s32.totalorder %s11, 3
    %p205 = pnand %p203, %p204
    %p206 = pneg %p205
    // Predicated region
    $region37: #{encoder_forward.8} parent=5 // pred_check
      _
    $region38: #{encoder_forward.8} parent=5 // pred_check_branch
      %208 = sbr.rel (%p205) target = $region40
    $region39: #{encoder_forward.8} parent=5 // pred_region
      %s209 = ssub.s32 %s11, 1
      %p210 = scmp.lt.s32.totalorder %s16, 1
      %s211 = scalar_select %p210, %s16, 1
      %s212 = smul.addr %s211, 8
      %s213 = smul.addr %s212, 4
      %s214 = scalar_lea.vmem %s0, %s213
      %p215 = pneg %p37
      %p216 = pneg %p34
      %p217 = scmp.lt.s32.totalorder %s16, 1
      %s218 = scalar_select %p217, %s16, 1
      %s219 = scalar_lea.vmem %s1, %s218
      %p220 = pneg %p63
      %p221 = pneg %p60
      %p222 = pneg %p84
      %p223 = pneg %p81
      %p224 = pneg %p105
      %p225 = pneg %p102
      %p226 = scmp.lt.s32.totalorder %s16, 1
      %s227 = scalar_select %p226, %s16, 1
      %s228 = smul.addr %s227, 8
      %s229 = scalar_lea.vmem %s4, %s228
      %p230 = pneg %p131
      %p231 = pneg %p128
      %p232 = pneg %p157
      %p233 = pneg %p154
      %p234 = scmp.lt.s32.totalorder %s16, 1
      %s235 = scalar_select %p234, %s16, 1
      %s236 = smul.addr %s235, 8
      %s237 = scalar_lea.vmem %s5, %s236
      %p238 = scmp.lt.s32.totalorder %s16, 1
      %s239 = scalar_select %p238, %s16, 1
      %s240 = smul.addr %s239, 8
      %s241 = smul.addr %s240, 4
      %s242 = scalar_lea.vmem %s0, %s241
      %p243 = scmp.lt.s32.totalorder %s16, 1
      %s244 = scalar_select %p243, %s16, 1
      %s245 = scalar_lea.vmem %s1, %s244
      %p246 = scmp.lt.s32.totalorder %s16, 1
      %s247 = scalar_select %p246, %s16, 1
      %s248 = smul.addr %s247, 8
      %s249 = scalar_lea.vmem %s4, %s248
      %p250 = scmp.lt.s32.totalorder %s16, 1
      %s251 = scalar_select %p250, %s16, 1
      %s252 = smul.addr %s251, 8
      %s253 = scalar_lea.vmem %s5, %s252
      %v254 = vld [vmem:[%s242] sm:$0x1]
      %v255 = vld [vmem:[%s242 + $0x4] sm:$0x1]
      %v256 = vld [vmem:[%s242 + $0x8] sm:$0x1]
      %v257 = vld [vmem:[%s242 + $0xc] sm:$0x1]
      %v258 = vld [vmem:[%s242 + $0x10] sm:$0x1]
      %v259 = vld [vmem:[%s242 + $0x14] sm:$0x1]
      %v260 = vld [vmem:[%s242 + $0x18] sm:$0x1]
      %v261 = vld [vmem:[%s242 + $0x1c] sm:$0x1]
      %v262 = vld [vmem:[%s242 + $0x1] sm:$0x1]
      %v263 = vld [vmem:[%s242 + $0x5] sm:$0x1]
      %v264 = vld [vmem:[%s242 + $0x9] sm:$0x1]
      %v265 = vld [vmem:[%s242 + $0xd] sm:$0x1]
      %v266 = vld [vmem:[%s242 + $0x11] sm:$0x1]
      %v267 = vld [vmem:[%s242 + $0x15] sm:$0x1]
      %v268 = vld [vmem:[%s242 + $0x19] sm:$0x1]
      %v269 = vld [vmem:[%s242 + $0x1d] sm:$0x1]
      %v270 = vld [vmem:[%s242 + $0x2] sm:$0x1]
      %v271 = vld [vmem:[%s242 + $0x6] sm:$0x1]
      %v272 = vld [vmem:[%s242 + $0xa] sm:$0x1]
      %v273 = vld [vmem:[%s242 + $0xe] sm:$0x1]
      %v274 = vld [vmem:[%s242 + $0x12] sm:$0x1]
      %v275 = vld [vmem:[%s242 + $0x16] sm:$0x1]
      %v276 = vld [vmem:[%s242 + $0x1a] sm:$0x1]
      %v277 = vld [vmem:[%s242 + $0x1e] sm:$0x1]
      %v278 = vld [vmem:[%s245] sm:$0x1]
      %v279 = vld [vmem:[%s249] sm:$0xff]
      %v280 = vld [vmem:[%s3] sm:$0x1]
      %v282 = vlaneseq
      %v283 = vshrl.u32 %v282, 7
      %v284 = vsub.s32 0, %v283
      %v285 = vrot.slane %v280, %v284
      %v287 = vadd.f32 %v279, %v285
      %v296 = vrot.slane %v255, 7
      %vm297 = vcmask 1041409
      %v298 = vsel %vm297, %v296, %v254
      %v299 = vrot.slane %v256, 6
      %vm300 = vcmask 1042434
      %v301 = vsel %vm300, %v299, %v298
      %v302 = vrot.slane %v257, 5
      %vm303 = vcmask 1043459
      %v304 = vsel %vm303, %v302, %v301
      %v305 = vrot.slane %v258, 4
      %vm306 = vcmask 1044484
      %v307 = vsel %vm306, %v305, %v304
      %v308 = vrot.slane %v259, 3
      %vm309 = vcmask 1045509
      %v310 = vsel %vm309, %v308, %v307
      %v311 = vrot.slane %v260, 2
      %vm312 = vcmask 1046534
      %v313 = vsel %vm312, %v311, %v310
      %v314 = vrot.slane %v261, 1
      %vm315 = vcmask 1047559
      %v316 = vsel %vm315, %v314, %v313
      %v325 = vrot.slane %v263, 7
      %v326 = vsel %vm297, %v325, %v262
      %v327 = vrot.slane %v264, 6
      %v328 = vsel %vm300, %v327, %v326
      %v329 = vrot.slane %v265, 5
      %v330 = vsel %vm303, %v329, %v328
      %v331 = vrot.slane %v266, 4
      %v332 = vsel %vm306, %v331, %v330
      %v333 = vrot.slane %v267, 3
      %v334 = vsel %vm309, %v333, %v332
      %v335 = vrot.slane %v268, 2
      %v336 = vsel %vm312, %v335, %v334
      %v337 = vrot.slane %v269, 1
      %v338 = vsel %vm315, %v337, %v336
      %vm339 = vcmask 64512
      %v340 = vsel %vm339, %v316, 0
      %v342 = vsel %vm339, %v338, 0
      %344 = vmatprep.subr.mxu0 0.0
      %345 = vmatpush1.xpose.msra.mxu0 %v342
      %346 = vmatprep.subr.mxu0 0.0
      %347 = vmatpush1.xpose.msra.mxu0 0.0
      %348 = vmatprep.subr.mxu0 0.0
      %349 = vmatpush1.xpose.msra.mxu0 0.0
      %350 = vmatprep.subr.mxu0 0.0
      %351 = vmatpush1.xpose.msra.mxu0 0.0
      %352 = vmatprep.subr.mxu0 0.0
      %353 = vmatpush1.xpose.msra.mxu0 0.0
      %354 = vmatprep.subr.mxu0 0.0
      %355 = vmatpush1.xpose.msra.mxu0 0.0
      %356 = vmatprep.subr.mxu0 0.0
      %357 = vmatpush1.xpose.msra.mxu0 0.0
      %358 = vmatprep.subr.mxu0 0.0
      %359 = vmatpush1.xpose.msra.mxu0 0.0
      %360 = vmatprep.subr.mxu0 0.0
      %361 = vmatpush1.xpose.msra.mxu0 0.0
      %362 = vmatprep.subr.mxu0 0.0
      %363 = vmatpush1.xpose.msra.mxu0 0.0
      %364 = vmatprep.subr.mxu0 0.0
      %365 = vmatpush1.xpose.msra.mxu0 0.0
      %366 = vmatprep.subr.mxu0 0.0
      %367 = vmatpush1.xpose.msra.mxu0 0.0
      %368 = vmatprep.subr.mxu0 0.0
      %369 = vmatpush1.xpose.msra.mxu0 0.0
      %370 = vmatprep.subr.mxu0 0.0
      %371 = vmatpush1.xpose.msra.mxu0 0.0
      %372 = vmatprep.subr.mxu0 0.0
      %373 = vmatpush1.xpose.msra.mxu0 0.0
      %374 = vmatprep.subr.mxu0 0.0
      %375 = vmatpush1.xpose.msra.mxu0 0.0
      %376 = vmatprep.subr.mxu0 0.0
      %377 = vmatpush1.xpose.msra.mxu0 0.0
      %378 = vmatprep.subr.mxu0 0.0
      %379 = vmatpush1.xpose.msra.mxu0 0.0
      %380 = vmatprep.subr.mxu0 0.0
      %381 = vmatpush1.xpose.msra.mxu0 0.0
      %382 = vmatprep.subr.mxu0 0.0
      %383 = vmatpush1.xpose.msra.mxu0 0.0
      %384 = vmatprep.subr.mxu0 0.0
      %385 = vmatpush1.xpose.msra.mxu0 0.0
      %386 = vmatprep.subr.mxu0 0.0
      %387 = vmatpush1.xpose.msra.mxu0 0.0
      %388 = vmatprep.subr.mxu0 0.0
      %389 = vmatpush1.xpose.msra.mxu0 0.0
      %390 = vmatprep.subr.mxu0 0.0
      %391 = vmatpush1.xpose.msra.mxu0 0.0
      %392 = vmatprep.subr.mxu0 0.0
      %393 = vmatpush1.xpose.msra.mxu0 0.0
      %394 = vmatprep.subr.mxu0 0.0
      %395 = vmatpush1.xpose.msra.mxu0 0.0
      %396 = vmatprep.subr.mxu0 0.0
      %397 = vmatpush1.xpose.msra.mxu0 0.0
      %398 = vmatprep.subr.mxu0 0.0
      %399 = vmatpush1.xpose.msra.mxu0 0.0
      %400 = vmatprep.subr.mxu0 0.0
      %401 = vmatpush1.xpose.msra.mxu0 0.0
      %402 = vmatprep.subr.mxu0 0.0
      %403 = vmatpush1.xpose.msra.mxu0 0.0
      %404 = vmatprep.subr.mxu0 0.0
      %405 = vmatpush1.xpose.msra.mxu0 0.0
      %406 = vmatprep.subr.mxu0 0.0
      %407 = vmatpush1.xpose.msra.mxu0 0.0
      %408 = vmatprep.mubr.f32.mxu0 0.0
      %409 = vmatmul.mubr.f32.gmra.mrb[0].mxu0 %v340
      %v410 = vpop.f32.mrb[0].mxu0
      %v411 = vadd.f32 0.0, %v410
      %v412 = vpop.f32.mrb[0].mxu0
      %413 = vdwg.mxu0
      %v414 = vmul.f32 %v411, 0.35355338
      %vm415 = vcmp.eq.f32.partialorder %v278, 0.0
      %v416 = vsel %vm415, 1, 0
      %v417 = vlaneseq
      %v418 = vshrl.u32 %v417, 7
      %v419 = vsub.s32 0, %v418
      %v420 = vrot.slane %v416, %v419
      %vm421 = vcmp.eq.s32.totalorder %v420, 1
      %v422 = vsel %vm421, -1e+09, %v414
      %v423 = vsel %vm339, %v422, -inf
      %424 = vmax.xlane.f32.xlu0 %v423
      %v425 = vpop.xlane.xlu0 %424
      %v426 = vsub.f32 %v422, %v425
      %v427 = vmul.f32 %v426, 1.442695
      %v428 = vpow.pop %v427
      %v429 = vsel %vm339, %v428, 0.0
      %430 = vadd.xlane.f32.xlu0 %v429
      %v431 = vpop.xlane.xlu0 %430
      %v432 = vrcp.pop %v431
      %v433 = vmul.f32 %v428, %v432
      %v442 = vrot.slane %v271, 7
      %v443 = vsel %vm297, %v442, %v270
      %v444 = vrot.slane %v272, 6
      %v445 = vsel %vm300, %v444, %v443
      %v446 = vrot.slane %v273, 5
      %v447 = vsel %vm303, %v446, %v445
      %v448 = vrot.slane %v274, 4
      %v449 = vsel %vm306, %v448, %v447
      %v450 = vrot.slane %v275, 3
      %v451 = vsel %vm309, %v450, %v449
      %v452 = vrot.slane %v276, 2
      %v453 = vsel %vm312, %v452, %v451
      %v454 = vrot.slane %v277, 1
      %v455 = vsel %vm315, %v454, %v453
      %v458 = vsel %vm339, %v433, 0
      %460 = vmatprep.subr.mxu0 0.0
      %461 = vmatpush1.msra.mxu0 %v455
      %462 = vmatprep.subr.mxu0 0.0
      %463 = vmatpush1.msra.mxu0 0.0
      %464 = vmatprep.subr.mxu0 0.0
      %465 = vmatpush1.msra.mxu0 0.0
      %466 = vmatprep.subr.mxu0 0.0
      %467 = vmatpush1.msra.mxu0 0.0
      %468 = vmatprep.subr.mxu0 0.0
      %469 = vmatpush1.msra.mxu0 0.0
      %470 = vmatprep.subr.mxu0 0.0
      %471 = vmatpush1.msra.mxu0 0.0
      %472 = vmatprep.subr.mxu0 0.0
      %473 = vmatpush1.msra.mxu0 0.0
      %474 = vmatprep.subr.mxu0 0.0
      %475 = vmatpush1.msra.mxu0 0.0
      %476 = vmatprep.subr.mxu0 0.0
      %477 = vmatpush1.msra.mxu0 0.0
      %478 = vmatprep.subr.mxu0 0.0
      %479 = vmatpush1.msra.mxu0 0.0
      %480 = vmatprep.subr.mxu0 0.0
      %481 = vmatpush1.msra.mxu0 0.0
      %482 = vmatprep.subr.mxu0 0.0
      %483 = vmatpush1.msra.mxu0 0.0
      %484 = vmatprep.subr.mxu0 0.0
      %485 = vmatpush1.msra.mxu0 0.0
      %486 = vmatprep.subr.mxu0 0.0
      %487 = vmatpush1.msra.mxu0 0.0
      %488 = vmatprep.subr.mxu0 0.0
      %489 = vmatpush1.msra.mxu0 0.0
      %490 = vmatprep.subr.mxu0 0.0
      %491 = vmatpush1.msra.mxu0 0.0
      %492 = vmatprep.subr.mxu0 0.0
      %493 = vmatpush1.msra.mxu0 0.0
      %494 = vmatprep.subr.mxu0 0.0
      %495 = vmatpush1.msra.mxu0 0.0
      %496 = vmatprep.subr.mxu0 0.0
      %497 = vmatpush1.msra.mxu0 0.0
      %498 = vmatprep.subr.mxu0 0.0
      %499 = vmatpush1.msra.mxu0 0.0
      %500 = vmatprep.subr.mxu0 0.0
      %501 = vmatpush1.msra.mxu0 0.0
      %502 = vmatprep.subr.mxu0 0.0
      %503 = vmatpush1.msra.mxu0 0.0
      %504 = vmatprep.subr.mxu0 0.0
      %505 = vmatpush1.msra.mxu0 0.0
      %506 = vmatprep.subr.mxu0 0.0
      %507 = vmatpush1.msra.mxu0 0.0
      %508 = vmatprep.subr.mxu0 0.0
      %509 = vmatpush1.msra.mxu0 0.0
      %510 = vmatprep.subr.mxu0 0.0
      %511 = vmatpush1.msra.mxu0 0.0
      %512 = vmatprep.subr.mxu0 0.0
      %513 = vmatpush1.msra.mxu0 0.0
      %514 = vmatprep.subr.mxu0 0.0
      %515 = vmatpush1.msra.mxu0 0.0
      %516 = vmatprep.subr.mxu0 0.0
      %517 = vmatpush1.msra.mxu0 0.0
      %518 = vmatprep.subr.mxu0 0.0
      %519 = vmatpush1.msra.mxu0 0.0
      %520 = vmatprep.subr.mxu0 0.0
      %521 = vmatpush1.msra.mxu0 0.0
      %522 = vmatprep.subr.mxu0 0.0
      %523 = vmatpush1.msra.mxu0 0.0
      %524 = vmatprep.mubr.f32.mxu0 0.0
      %525 = vmatmul.mubr.f32.gmra.mrb[0].mxu0 %v458
      %v526 = vpop.f32.mrb[0].mxu0
      %v527 = vadd.f32 0.0, %v526
      %v528 = vpop.f32.mrb[0].mxu0
      %529 = vdwg.mxu0
      %v530 = vld [vmem:[%s2] sm:$0xff]
      %v532 = vsel %vm339, %v527, 0
      %534 = vmatprep.subr.mxu0 0.0
      %535 = vmatpush1.msra.mxu0 %v530
      %536 = vmatprep.subr.mxu0 0.0
      %537 = vmatpush1.msra.mxu0 0.0
      %538 = vmatprep.subr.mxu0 0.0
      %539 = vmatpush1.msra.mxu0 0.0
      %540 = vmatprep.subr.mxu0 0.0
      %541 = vmatpush1.msra.mxu0 0.0
      %542 = vmatprep.subr.mxu0 0.0
      %543 = vmatpush1.msra.mxu0 0.0
      %544 = vmatprep.subr.mxu0 0.0
      %545 = vmatpush1.msra.mxu0 0.0
      %546 = vmatprep.subr.mxu0 0.0
      %547 = vmatpush1.msra.mxu0 0.0
      %548 = vmatprep.subr.mxu0 0.0
      %549 = vmatpush1.msra.mxu0 0.0
      %550 = vmatprep.subr.mxu0 0.0
      %551 = vmatpush1.msra.mxu0 0.0
      %552 = vmatprep.subr.mxu0 0.0
      %553 = vmatpush1.msra.mxu0 0.0
      %554 = vmatprep.subr.mxu0 0.0
      %555 = vmatpush1.msra.mxu0 0.0
      %556 = vmatprep.subr.mxu0 0.0
      %557 = vmatpush1.msra.mxu0 0.0
      %558 = vmatprep.subr.mxu0 0.0
      %559 = vmatpush1.msra.mxu0 0.0
      %560 = vmatprep.subr.mxu0 0.0
      %561 = vmatpush1.msra.mxu0 0.0
      %562 = vmatprep.subr.mxu0 0.0
      %563 = vmatpush1.msra.mxu0 0.0
      %564 = vmatprep.subr.mxu0 0.0
      %565 = vmatpush1.msra.mxu0 0.0
      %566 = vmatprep.subr.mxu0 0.0
      %567 = vmatpush1.msra.mxu0 0.0
      %568 = vmatprep.subr.mxu0 0.0
      %569 = vmatpush1.msra.mxu0 0.0
      %570 = vmatprep.subr.mxu0 0.0
      %571 = vmatpush1.msra.mxu0 0.0
      %572 = vmatprep.subr.mxu0 0.0
      %573 = vmatpush1.msra.mxu0 0.0
      %574 = vmatprep.subr.mxu0 0.0
      %575 = vmatpush1.msra.mxu0 0.0
      %576 = vmatprep.subr.mxu0 0.0
      %577 = vmatpush1.msra.mxu0 0.0
      %578 = vmatprep.subr.mxu0 0.0
      %579 = vmatpush1.msra.mxu0 0.0
      %580 = vmatprep.subr.mxu0 0.0
      %581 = vmatpush1.msra.mxu0 0.0
      %582 = vmatprep.subr.mxu0 0.0
      %583 = vmatpush1.msra.mxu0 0.0
      %584 = vmatprep.subr.mxu0 0.0
      %585 = vmatpush1.msra.mxu0 0.0
      %586 = vmatprep.subr.mxu0 0.0
      %587 = vmatpush1.msra.mxu0 0.0
      %588 = vmatprep.subr.mxu0 0.0
      %589 = vmatpush1.msra.mxu0 0.0
      %590 = vmatprep.subr.mxu0 0.0
      %591 = vmatpush1.msra.mxu0 0.0
      %592 = vmatprep.subr.mxu0 0.0
      %593 = vmatpush1.msra.mxu0 0.0
      %594 = vmatprep.subr.mxu0 0.0
      %595 = vmatpush1.msra.mxu0 0.0
      %596 = vmatprep.subr.mxu0 0.0
      %597 = vmatpush1.msra.mxu0 0.0
      %598 = vmatprep.mubr.f32.mxu0 0.0
      %599 = vmatmul.mubr.f32.gmra.mrb[0].mxu0 %v532
      %v600 = vpop.f32.mrb[0].mxu0
      %v601 = vadd.f32 0.0, %v600
      %v602 = vpop.f32.mrb[0].mxu0
      %603 = vdwg.mxu0
      %v604 = vadd.f32 %v287, %v601
      %605 = vrot.lane.b32.xlu0 %v316, 120
      %v606 = vpop.permute.xlu0 %605
      %607 = vrot.lane.b32.xlu0 %v338, 120
      %v608 = vpop.permute.xlu0 %607
      %v609 = vsel %vm339, %v606, 0
      %v611 = vsel %vm339, %v608, 0
      %613 = vmatprep.subr.mxu0 0.0
      %614 = vmatpush1.xpose.msra.mxu0 %v611
      %615 = vmatprep.subr.mxu0 0.0
      %616 = vmatpush1.xpose.msra.mxu0 0.0
      %617 = vmatprep.subr.mxu0 0.0
      %618 = vmatpush1.xpose.msra.mxu0 0.0
      %619 = vmatprep.subr.mxu0 0.0
      %620 = vmatpush1.xpose.msra.mxu0 0.0
      %621 = vmatprep.subr.mxu0 0.0
      %622 = vmatpush1.xpose.msra.mxu0 0.0
      %623 = vmatprep.subr.mxu0 0.0
      %624 = vmatpush1.xpose.msra.mxu0 0.0
      %625 = vmatprep.subr.mxu0 0.0
      %626 = vmatpush1.xpose.msra.mxu0 0.0
      %627 = vmatprep.subr.mxu0 0.0
      %628 = vmatpush1.xpose.msra.mxu0 0.0
      %629 = vmatprep.subr.mxu0 0.0
      %630 = vmatpush1.xpose.msra.mxu0 0.0
      %631 = vmatprep.subr.mxu0 0.0
      %632 = vmatpush1.xpose.msra.mxu0 0.0
      %633 = vmatprep.subr.mxu0 0.0
      %634 = vmatpush1.xpose.msra.mxu0 0.0
      %635 = vmatprep.subr.mxu0 0.0
      %636 = vmatpush1.xpose.msra.mxu0 0.0
      %637 = vmatprep.subr.mxu0 0.0
      %638 = vmatpush1.xpose.msra.mxu0 0.0
      %639 = vmatprep.subr.mxu0 0.0
      %640 = vmatpush1.xpose.msra.mxu0 0.0
      %641 = vmatprep.subr.mxu0 0.0
      %642 = vmatpush1.xpose.msra.mxu0 0.0
      %643 = vmatprep.subr.mxu0 0.0
      %644 = vmatpush1.xpose.msra.mxu0 0.0
      %645 = vmatprep.subr.mxu0 0.0
      %646 = vmatpush1.xpose.msra.mxu0 0.0
      %647 = vmatprep.subr.mxu0 0.0
      %648 = vmatpush1.xpose.msra.mxu0 0.0
      %649 = vmatprep.subr.mxu0 0.0
      %650 = vmatpush1.xpose.msra.mxu0 0.0
      %651 = vmatprep.subr.mxu0 0.0
      %652 = vmatpush1.xpose.msra.mxu0 0.0
      %653 = vmatprep.subr.mxu0 0.0
      %654 = vmatpush1.xpose.msra.mxu0 0.0
      %655 = vmatprep.subr.mxu0 0.0
      %656 = vmatpush1.xpose.msra.mxu0 0.0
      %657 = vmatprep.subr.mxu0 0.0
      %658 = vmatpush1.xpose.msra.mxu0 0.0
      %659 = vmatprep.subr.mxu0 0.0
      %660 = vmatpush1.xpose.msra.mxu0 0.0
      %661 = vmatprep.subr.mxu0 0.0
      %662 = vmatpush1.xpose.msra.mxu0 0.0
      %663 = vmatprep.subr.mxu0 0.0
      %664 = vmatpush1.xpose.msra.mxu0 0.0
      %665 = vmatprep.subr.mxu0 0.0
      %666 = vmatpush1.xpose.msra.mxu0 0.0
      %667 = vmatprep.subr.mxu0 0.0
      %668 = vmatpush1.xpose.msra.mxu0 0.0
      %669 = vmatprep.subr.mxu0 0.0
      %670 = vmatpush1.xpose.msra.mxu0 0.0
      %671 = vmatprep.subr.mxu0 0.0
      %672 = vmatpush1.xpose.msra.mxu0 0.0
      %673 = vmatprep.subr.mxu0 0.0
      %674 = vmatpush1.xpose.msra.mxu0 0.0
      %675 = vmatprep.subr.mxu0 0.0
      %676 = vmatpush1.xpose.msra.mxu0 0.0
      %677 = vmatprep.mubr.f32.mxu0 0.0
      %678 = vmatmul.mubr.f32.gmra.mrb[0].mxu0 %v609
      %v679 = vpop.f32.mrb[0].mxu0
      %v680 = vadd.f32 0.0, %v679
      %v681 = vpop.f32.mrb[0].mxu0
      %682 = vdwg.mxu0
      %v683 = vmul.f32 %v680, 0.35355338
      %v684 = vsel %vm421, -1e+09, %v683
      %v685 = vsel %vm339, %v684, -inf
      %686 = vmax.xlane.f32.xlu0 %v685
      %v687 = vpop.xlane.xlu0 %686
      %v688 = vsub.f32 %v684, %v687
      %v689 = vmul.f32 %v688, 1.442695
      %v690 = vpow.pop %v689
      %v691 = vsel %vm339, %v690, 0.0
      %692 = vadd.xlane.f32.xlu0 %v691
      %v693 = vpop.xlane.xlu0 %692
      %v694 = vrcp.pop %v693
      %v695 = vmul.f32 %v690, %v694
      %696 = vrot.lane.b32.xlu0 %v455, 120
      %v697 = vpop.permute.xlu0 %696
      %v700 = vsel %vm339, %v695, 0
      %702 = vmatprep.subr.mxu0 0.0
      %703 = vmatpush1.msra.mxu0 %v697
      %704 = vmatprep.subr.mxu0 0.0
      %705 = vmatpush1.msra.mxu0 0.0
      %706 = vmatprep.subr.mxu0 0.0
      %707 = vmatpush1.msra.mxu0 0.0
      %708 = vmatprep.subr.mxu0 0.0
      %709 = vmatpush1.msra.mxu0 0.0
      %710 = vmatprep.subr.mxu0 0.0
      %711 = vmatpush1.msra.mxu0 0.0
      %712 = vmatprep.subr.mxu0 0.0
      %713 = vmatpush1.msra.mxu0 0.0
      %714 = vmatprep.subr.mxu0 0.0
      %715 = vmatpush1.msra.mxu0 0.0
      %716 = vmatprep.subr.mxu0 0.0
      %717 = vmatpush1.msra.mxu0 0.0
      %718 = vmatprep.subr.mxu0 0.0
      %719 = vmatpush1.msra.mxu0 0.0
      %720 = vmatprep.subr.mxu0 0.0
      %721 = vmatpush1.msra.mxu0 0.0
      %722 = vmatprep.subr.mxu0 0.0
      %723 = vmatpush1.msra.mxu0 0.0
      %724 = vmatprep.subr.mxu0 0.0
      %725 = vmatpush1.msra.mxu0 0.0
      %726 = vmatprep.subr.mxu0 0.0
      %727 = vmatpush1.msra.mxu0 0.0
      %728 = vmatprep.subr.mxu0 0.0
      %729 = vmatpush1.msra.mxu0 0.0
      %730 = vmatprep.subr.mxu0 0.0
      %731 = vmatpush1.msra.mxu0 0.0
      %732 = vmatprep.subr.mxu0 0.0
      %733 = vmatpush1.msra.mxu0 0.0
      %734 = vmatprep.subr.mxu0 0.0
      %735 = vmatpush1.msra.mxu0 0.0
      %736 = vmatprep.subr.mxu0 0.0
      %737 = vmatpush1.msra.mxu0 0.0
      %738 = vmatprep.subr.mxu0 0.0
      %739 = vmatpush1.msra.mxu0 0.0
      %740 = vmatprep.subr.mxu0 0.0
      %741 = vmatpush1.msra.mxu0 0.0
      %742 = vmatprep.subr.mxu0 0.0
      %743 = vmatpush1.msra.mxu0 0.0
      %744 = vmatprep.subr.mxu0 0.0
      %745 = vmatpush1.msra.mxu0 0.0
      %746 = vmatprep.subr.mxu0 0.0
      %747 = vmatpush1.msra.mxu0 0.0
      %748 = vmatprep.subr.mxu0 0.0
      %749 = vmatpush1.msra.mxu0 0.0
      %750 = vmatprep.subr.mxu0 0.0
      %751 = vmatpush1.msra.mxu0 0.0
      %752 = vmatprep.subr.mxu0 0.0
      %753 = vmatpush1.msra.mxu0 0.0
      %754 = vmatprep.subr.mxu0 0.0
      %755 = vmatpush1.msra.mxu0 0.0
      %756 = vmatprep.subr.mxu0 0.0
      %757 = vmatpush1.msra.mxu0 0.0
      %758 = vmatprep.subr.mxu0 0.0
      %759 = vmatpush1.msra.mxu0 0.0
      %760 = vmatprep.subr.mxu0 0.0
      %761 = vmatpush1.msra.mxu0 0.0
      %762 = vmatprep.subr.mxu0 0.0
      %763 = vmatpush1.msra.mxu0 0.0
      %764 = vmatprep.subr.mxu0 0.0
      %765 = vmatpush1.msra.mxu0 0.0
      %766 = vmatprep.mubr.f32.mxu0 0.0
      %767 = vmatmul.mubr.f32.gmra.mrb[0].mxu0 %v700
      %v768 = vpop.f32.mrb[0].mxu0
      %v769 = vadd.f32 0.0, %v768
      %v770 = vpop.f32.mrb[0].mxu0
      %771 = vdwg.mxu0
      %v772 = vld [vmem:[%s2 + $0x8] sm:$0xff]
      %v774 = vsel %vm339, %v769, 0
      %776 = vmatprep.subr.mxu0 0.0
      %777 = vmatpush1.msra.mxu0 %v772
      %778 = vmatprep.subr.mxu0 0.0
      %779 = vmatpush1.msra.mxu0 0.0
      %780 = vmatprep.subr.mxu0 0.0
      %781 = vmatpush1.msra.mxu0 0.0
      %782 = vmatprep.subr.mxu0 0.0
      %783 = vmatpush1.msra.mxu0 0.0
      %784 = vmatprep.subr.mxu0 0.0
      %785 = vmatpush1.msra.mxu0 0.0
      %786 = vmatprep.subr.mxu0 0.0
      %787 = vmatpush1.msra.mxu0 0.0
      %788 = vmatprep.subr.mxu0 0.0
      %789 = vmatpush1.msra.mxu0 0.0
      %790 = vmatprep.subr.mxu0 0.0
      %791 = vmatpush1.msra.mxu0 0.0
      %792 = vmatprep.subr.mxu0 0.0
      %793 = vmatpush1.msra.mxu0 0.0
      %794 = vmatprep.subr.mxu0 0.0
      %795 = vmatpush1.msra.mxu0 0.0
      %796 = vmatprep.subr.mxu0 0.0
      %797 = vmatpush1.msra.mxu0 0.0
      %798 = vmatprep.subr.mxu0 0.0
      %799 = vmatpush1.msra.mxu0 0.0
      %800 = vmatprep.subr.mxu0 0.0
      %801 = vmatpush1.msra.mxu0 0.0
      %802 = vmatprep.subr.mxu0 0.0
      %803 = vmatpush1.msra.mxu0 0.0
      %804 = vmatprep.subr.mxu0 0.0
      %805 = vmatpush1.msra.mxu0 0.0
      %806 = vmatprep.subr.mxu0 0.0
      %807 = vmatpush1.msra.mxu0 0.0
      %808 = vmatprep.subr.mxu0 0.0
      %809 = vmatpush1.msra.mxu0 0.0
      %810 = vmatprep.subr.mxu0 0.0
      %811 = vmatpush1.msra.mxu0 0.0
      %812 = vmatprep.subr.mxu0 0.0
      %813 = vmatpush1.msra.mxu0 0.0
      %814 = vmatprep.subr.mxu0 0.0
      %815 = vmatpush1.msra.mxu0 0.0
      %816 = vmatprep.subr.mxu0 0.0
      %817 = vmatpush1.msra.mxu0 0.0
      %818 = vmatprep.subr.mxu0 0.0
      %819 = vmatpush1.msra.mxu0 0.0
      %820 = vmatprep.subr.mxu0 0.0
      %821 = vmatpush1.msra.mxu0 0.0
      %822 = vmatprep.subr.mxu0 0.0
      %823 = vmatpush1.msra.mxu0 0.0
      %824 = vmatprep.subr.mxu0 0.0
      %825 = vmatpush1.msra.mxu0 0.0
      %826 = vmatprep.subr.mxu0 0.0
      %827 = vmatpush1.msra.mxu0 0.0
      %828 = vmatprep.subr.mxu0 0.0
      %829 = vmatpush1.msra.mxu0 0.0
      %830 = vmatprep.subr.mxu0 0.0
      %831 = vmatpush1.msra.mxu0 0.0
      %832 = vmatprep.subr.mxu0 0.0
      %833 = vmatpush1.msra.mxu0 0.0
      %834 = vmatprep.subr.mxu0 0.0
      %835 = vmatpush1.msra.mxu0 0.0
      %836 = vmatprep.subr.mxu0 0.0
      %837 = vmatpush1.msra.mxu0 0.0
      %838 = vmatprep.subr.mxu0 0.0
      %839 = vmatpush1.msra.mxu0 0.0
      %840 = vmatprep.mubr.f32.mxu0 0.0
      %841 = vmatmul.mubr.f32.gmra.mrb[0].mxu0 %v774
      %v842 = vpop.f32.mrb[0].mxu0
      %v843 = vadd.f32 0.0, %v842
      %v844 = vpop.f32.mrb[0].mxu0
      %845 = vdwg.mxu0
      %v846 = vadd.f32 %v604, %v843
      %847 = vrot.lane.b32.xlu0 %v316, 112
      %v848 = vpop.permute.xlu0 %847
      %849 = vrot.lane.b32.xlu0 %v338, 112
      %v850 = vpop.permute.xlu0 %849
      %v851 = vsel %vm339, %v848, 0
      %v853 = vsel %vm339, %v850, 0
      %855 = vmatprep.subr.mxu0 0.0
      %856 = vmatpush1.xpose.msra.mxu0 %v853
      %857 = vmatprep.subr.mxu0 0.0
      %858 = vmatpush1.xpose.msra.mxu0 0.0
      %859 = vmatprep.subr.mxu0 0.0
      %860 = vmatpush1.xpose.msra.mxu0 0.0
      %861 = vmatprep.subr.mxu0 0.0
      %862 = vmatpush1.xpose.msra.mxu0 0.0
      %863 = vmatprep.subr.mxu0 0.0
      %864 = vmatpush1.xpose.msra.mxu0 0.0
      %865 = vmatprep.subr.mxu0 0.0
      %866 = vmatpush1.xpose.msra.mxu0 0.0
      %867 = vmatprep.subr.mxu0 0.0
      %868 = vmatpush1.xpose.msra.mxu0 0.0
      %869 = vmatprep.subr.mxu0 0.0
      %870 = vmatpush1.xpose.msra.mxu0 0.0
      %871 = vmatprep.subr.mxu0 0.0
      %872 = vmatpush1.xpose.msra.mxu0 0.0
      %873 = vmatprep.subr.mxu0 0.0
      %874 = vmatpush1.xpose.msra.mxu0 0.0
      %875 = vmatprep.subr.mxu0 0.0
      %876 = vmatpush1.xpose.msra.mxu0 0.0
      %877 = vmatprep.subr.mxu0 0.0
      %878 = vmatpush1.xpose.msra.mxu0 0.0
      %879 = vmatprep.subr.mxu0 0.0
      %880 = vmatpush1.xpose.msra.mxu0 0.0
      %881 = vmatprep.subr.mxu0 0.0
      %882 = vmatpush1.xpose.msra.mxu0 0.0
      %883 = vmatprep.subr.mxu0 0.0
      %884 = vmatpush1.xpose.msra.mxu0 0.0
      %885 = vmatprep.subr.mxu0 0.0
      %886 = vmatpush1.xpose.msra.mxu0 0.0
      %887 = vmatprep.subr.mxu0 0.0
      %888 = vmatpush1.xpose.msra.mxu0 0.0
      %889 = vmatprep.subr.mxu0 0.0
      %890 = vmatpush1.xpose.msra.mxu0 0.0
      %891 = vmatprep.subr.mxu0 0.0
      %892 = vmatpush1.xpose.msra.mxu0 0.0
      %893 = vmatprep.subr.mxu0 0.0
      %894 = vmatpush1.xpose.msra.mxu0 0.0
      %895 = vmatprep.subr.mxu0 0.0
      %896 = vmatpush1.xpose.msra.mxu0 0.0
      %897 = vmatprep.subr.mxu0 0.0
      %898 = vmatpush1.xpose.msra.mxu0 0.0
      %899 = vmatprep.subr.mxu0 0.0
      %900 = vmatpush1.xpose.msra.mxu0 0.0
      %901 = vmatprep.subr.mxu0 0.0
      %902 = vmatpush1.xpose.msra.mxu0 0.0
      %903 = vmatprep.subr.mxu0 0.0
      %904 = vmatpush1.xpose.msra.mxu0 0.0
      %905 = vmatprep.subr.mxu0 0.0
      %906 = vmatpush1.xpose.msra.mxu0 0.0
      %907 = vmatprep.subr.mxu0 0.0
      %908 = vmatpush1.xpose.msra.mxu0 0.0
      %909 = vmatprep.subr.mxu0 0.0
      %910 = vmatpush1.xpose.msra.mxu0 0.0
      %911 = vmatprep.subr.mxu0 0.0
      %912 = vmatpush1.xpose.msra.mxu0 0.0
      %913 = vmatprep.subr.mxu0 0.0
      %914 = vmatpush1.xpose.msra.mxu0 0.0
      %915 = vmatprep.subr.mxu0 0.0
      %916 = vmatpush1.xpose.msra.mxu0 0.0
      %917 = vmatprep.subr.mxu0 0.0
      %918 = vmatpush1.xpose.msra.mxu0 0.0
      %919 = vmatprep.mubr.f32.mxu0 0.0
      %920 = vmatmul.mubr.f32.gmra.mrb[0].mxu0 %v851
      %v921 = vpop.f32.mrb[0].mxu0
      %v922 = vadd.f32 0.0, %v921
      %v923 = vpop.f32.mrb[0].mxu0
      %924 = vdwg.mxu0
      %v925 = vmul.f32 %v922, 0.35355338
      %v926 = vsel %vm421, -1e+09, %v925
      %v927 = vsel %vm339, %v926, -inf
      %928 = vmax.xlane.f32.xlu0 %v927
      %v929 = vpop.xlane.xlu0 %928
      %v930 = vsub.f32 %v926, %v929
      %v931 = vmul.f32 %v930, 1.442695
      %v932 = vpow.pop %v931
      %v933 = vsel %vm339, %v932, 0.0
      %934 = vadd.xlane.f32.xlu0 %v933
      %v935 = vpop.xlane.xlu0 %934
      %v936 = vrcp.pop %v935
      %v937 = vmul.f32 %v932, %v936
      %938 = vrot.lane.b32.xlu0 %v455, 112
      %v939 = vpop.permute.xlu0 %938
      %v942 = vsel %vm339, %v937, 0
      %944 = vmatprep.subr.mxu0 0.0
      %945 = vmatpush1.msra.mxu0 %v939
      %946 = vmatprep.subr.mxu0 0.0
      %947 = vmatpush1.msra.mxu0 0.0
      %948 = vmatprep.subr.mxu0 0.0
      %949 = vmatpush1.msra.mxu0 0.0
      %950 = vmatprep.subr.mxu0 0.0
      %951 = vmatpush1.msra.mxu0 0.0
      %952 = vmatprep.subr.mxu0 0.0
      %953 = vmatpush1.msra.mxu0 0.0
      %954 = vmatprep.subr.mxu0 0.0
      %955 = vmatpush1.msra.mxu0 0.0
      %956 = vmatprep.subr.mxu0 0.0
      %957 = vmatpush1.msra.mxu0 0.0
      %958 = vmatprep.subr.mxu0 0.0
      %959 = vmatpush1.msra.mxu0 0.0
      %960 = vmatprep.subr.mxu0 0.0
      %961 = vmatpush1.msra.mxu0 0.0
      %962 = vmatprep.subr.mxu0 0.0
      %963 = vmatpush1.msra.mxu0 0.0
      %964 = vmatprep.subr.mxu0 0.0
      %965 = vmatpush1.msra.mxu0 0.0
      %966 = vmatprep.subr.mxu0 0.0
      %967 = vmatpush1.msra.mxu0 0.0
      %968 = vmatprep.subr.mxu0 0.0
      %969 = vmatpush1.msra.mxu0 0.0
      %970 = vmatprep.subr.mxu0 0.0
      %971 = vmatpush1.msra.mxu0 0.0
      %972 = vmatprep.subr.mxu0 0.0
      %973 = vmatpush1.msra.mxu0 0.0
      %974 = vmatprep.subr.mxu0 0.0
      %975 = vmatpush1.msra.mxu0 0.0
      %976 = vmatprep.subr.mxu0 0.0
      %977 = vmatpush1.msra.mxu0 0.0
      %978 = vmatprep.subr.mxu0 0.0
      %979 = vmatpush1.msra.mxu0 0.0
      %980 = vmatprep.subr.mxu0 0.0
      %981 = vmatpush1.msra.mxu0 0.0
      %982 = vmatprep.subr.mxu0 0.0
      %983 = vmatpush1.msra.mxu0 0.0
      %984 = vmatprep.subr.mxu0 0.0
      %985 = vmatpush1.msra.mxu0 0.0
      %986 = vmatprep.subr.mxu0 0.0
      %987 = vmatpush1.msra.mxu0 0.0
      %988 = vmatprep.subr.mxu0 0.0
      %989 = vmatpush1.msra.mxu0 0.0
      %990 = vmatprep.subr.mxu0 0.0
      %991 = vmatpush1.msra.mxu0 0.0
      %992 = vmatprep.subr.mxu0 0.0
      %993 = vmatpush1.msra.mxu0 0.0
      %994 = vmatprep.subr.mxu0 0.0
      %995 = vmatpush1.msra.mxu0 0.0
      %996 = vmatprep.subr.mxu0 0.0
      %997 = vmatpush1.msra.mxu0 0.0
      %998 = vmatprep.subr.mxu0 0.0
      %999 = vmatpush1.msra.mxu0 0.0
      %1000 = vmatprep.subr.mxu0 0.0
      %1001 = vmatpush1.msra.mxu0 0.0
      %1002 = vmatprep.subr.mxu0 0.0
      %1003 = vmatpush1.msra.mxu0 0.0
      %1004 = vmatprep.subr.mxu0 0.0
      %1005 = vmatpush1.msra.mxu0 0.0
      %1006 = vmatprep.subr.mxu0 0.0
      %1007 = vmatpush1.msra.mxu0 0.0
      %1008 = vmatprep.mubr.f32.mxu0 0.0
      %1009 = vmatmul.mubr.f32.gmra.mrb[0].mxu0 %v942
      %v1010 = vpop.f32.mrb[0].mxu0
      %v1011 = vadd.f32 0.0, %v1010
      %v1012 = vpop.f32.mrb[0].mxu0
      %1013 = vdwg.mxu0
      %v1014 = vld [vmem:[%s2 + $0x10] sm:$0xff]
      %v1016 = vsel %vm339, %v1011, 0
      %1018 = vmatprep.subr.mxu0 0.0
      %1019 = vmatpush1.msra.mxu0 %v1014
      %1020 = vmatprep.subr.mxu0 0.0
      %1021 = vmatpush1.msra.mxu0 0.0
      %1022 = vmatprep.subr.mxu0 0.0
      %1023 = vmatpush1.msra.mxu0 0.0
      %1024 = vmatprep.subr.mxu0 0.0
      %1025 = vmatpush1.msra.mxu0 0.0
      %1026 = vmatprep.subr.mxu0 0.0
      %1027 = vmatpush1.msra.mxu0 0.0
      %1028 = vmatprep.subr.mxu0 0.0
      %1029 = vmatpush1.msra.mxu0 0.0
      %1030 = vmatprep.subr.mxu0 0.0
      %1031 = vmatpush1.msra.mxu0 0.0
      %1032 = vmatprep.subr.mxu0 0.0
      %1033 = vmatpush1.msra.mxu0 0.0
      %1034 = vmatprep.subr.mxu0 0.0
      %1035 = vmatpush1.msra.mxu0 0.0
      %1036 = vmatprep.subr.mxu0 0.0
      %1037 = vmatpush1.msra.mxu0 0.0
      %1038 = vmatprep.subr.mxu0 0.0
      %1039 = vmatpush1.msra.mxu0 0.0
      %1040 = vmatprep.subr.mxu0 0.0
      %1041 = vmatpush1.msra.mxu0 0.0
      %1042 = vmatprep.subr.mxu0 0.0
      %1043 = vmatpush1.msra.mxu0 0.0
      %1044 = vmatprep.subr.mxu0 0.0
      %1045 = vmatpush1.msra.mxu0 0.0
      %1046 = vmatprep.subr.mxu0 0.0
      %1047 = vmatpush1.msra.mxu0 0.0
      %1048 = vmatprep.subr.mxu0 0.0
      %1049 = vmatpush1.msra.mxu0 0.0
      %1050 = vmatprep.subr.mxu0 0.0
      %1051 = vmatpush1.msra.mxu0 0.0
      %1052 = vmatprep.subr.mxu0 0.0
      %1053 = vmatpush1.msra.mxu0 0.0
      %1054 = vmatprep.subr.mxu0 0.0
      %1055 = vmatpush1.msra.mxu0 0.0
      %1056 = vmatprep.subr.mxu0 0.0
      %1057 = vmatpush1.msra.mxu0 0.0
      %1058 = vmatprep.subr.mxu0 0.0
      %1059 = vmatpush1.msra.mxu0 0.0
      %1060 = vmatprep.subr.mxu0 0.0
      %1061 = vmatpush1.msra.mxu0 0.0
      %1062 = vmatprep.subr.mxu0 0.0
      %1063 = vmatpush1.msra.mxu0 0.0
      %1064 = vmatprep.subr.mxu0 0.0
      %1065 = vmatpush1.msra.mxu0 0.0
      %1066 = vmatprep.subr.mxu0 0.0
      %1067 = vmatpush1.msra.mxu0 0.0
      %1068 = vmatprep.subr.mxu0 0.0
      %1069 = vmatpush1.msra.mxu0 0.0
      %1070 = vmatprep.subr.mxu0 0.0
      %1071 = vmatpush1.msra.mxu0 0.0
      %1072 = vmatprep.subr.mxu0 0.0
      %1073 = vmatpush1.msra.mxu0 0.0
      %1074 = vmatprep.subr.mxu0 0.0
      %1075 = vmatpush1.msra.mxu0 0.0
      %1076 = vmatprep.subr.mxu0 0.0
      %1077 = vmatpush1.msra.mxu0 0.0
      %1078 = vmatprep.subr.mxu0 0.0
      %1079 = vmatpush1.msra.mxu0 0.0
      %1080 = vmatprep.subr.mxu0 0.0
      %1081 = vmatpush1.msra.mxu0 0.0
      %1082 = vmatprep.mubr.f32.mxu0 0.0
      %1083 = vmatmul.mubr.f32.gmra.mrb[0].mxu0 %v1016
      %v1084 = vpop.f32.mrb[0].mxu0
      %v1085 = vadd.f32 0.0, %v1084
      %v1086 = vpop.f32.mrb[0].mxu0
      %1087 = vdwg.mxu0
      %v1088 = vadd.f32 %v846, %v1085
      %1089 = vrot.lane.b32.xlu0 %v316, 104
      %v1090 = vpop.permute.xlu0 %1089
      %1091 = vrot.lane.b32.xlu0 %v338, 104
      %v1092 = vpop.permute.xlu0 %1091
      %v1093 = vsel %vm339, %v1090, 0
      %v1095 = vsel %vm339, %v1092, 0
      %1097 = vmatprep.subr.mxu0 0.0
      %1098 = vmatpush1.xpose.msra.mxu0 %v1095
      %1099 = vmatprep.subr.mxu0 0.0
      %1100 = vmatpush1.xpose.msra.mxu0 0.0
      %1101 = vmatprep.subr.mxu0 0.0
      %1102 = vmatpush1.xpose.msra.mxu0 0.0
      %1103 = vmatprep.subr.mxu0 0.0
      %1104 = vmatpush1.xpose.msra.mxu0 0.0
      %1105 = vmatprep.subr.mxu0 0.0
      %1106 = vmatpush1.xpose.msra.mxu0 0.0
      %1107 = vmatprep.subr.mxu0 0.0
      %1108 = vmatpush1.xpose.msra.mxu0 0.0
      %1109 = vmatprep.subr.mxu0 0.0
      %1110 = vmatpush1.xpose.msra.mxu0 0.0
      %1111 = vmatprep.subr.mxu0 0.0
      %1112 = vmatpush1.xpose.msra.mxu0 0.0
      %1113 = vmatprep.subr.mxu0 0.0
      %1114 = vmatpush1.xpose.msra.mxu0 0.0
      %1115 = vmatprep.subr.mxu0 0.0
      %1116 = vmatpush1.xpose.msra.mxu0 0.0
      %1117 = vmatprep.subr.mxu0 0.0
      %1118 = vmatpush1.xpose.msra.mxu0 0.0
      %1119 = vmatprep.subr.mxu0 0.0
      %1120 = vmatpush1.xpose.msra.mxu0 0.0
      %1121 = vmatprep.subr.mxu0 0.0
      %1122 = vmatpush1.xpose.msra.mxu0 0.0
      %1123 = vmatprep.subr.mxu0 0.0
      %1124 = vmatpush1.xpose.msra.mxu0 0.0
      %1125 = vmatprep.subr.mxu0 0.0
      %1126 = vmatpush1.xpose.msra.mxu0 0.0
      %1127 = vmatprep.subr.mxu0 0.0
      %1128 = vmatpush1.xpose.msra.mxu0 0.0
      %1129 = vmatprep.subr.mxu0 0.0
      %1130 = vmatpush1.xpose.msra.mxu0 0.0
      %1131 = vmatprep.subr.mxu0 0.0
      %1132 = vmatpush1.xpose.msra.mxu0 0.0
      %1133 = vmatprep.subr.mxu0 0.0
      %1134 = vmatpush1.xpose.msra.mxu0 0.0
      %1135 = vmatprep.subr.mxu0 0.0
      %1136 = vmatpush1.xpose.msra.mxu0 0.0
      %1137 = vmatprep.subr.mxu0 0.0
      %1138 = vmatpush1.xpose.msra.mxu0 0.0
      %1139 = vmatprep.subr.mxu0 0.0
      %1140 = vmatpush1.xpose.msra.mxu0 0.0
      %1141 = vmatprep.subr.mxu0 0.0
      %1142 = vmatpush1.xpose.msra.mxu0 0.0
      %1143 = vmatprep.subr.mxu0 0.0
      %1144 = vmatpush1.xpose.msra.mxu0 0.0
      %1145 = vmatprep.subr.mxu0 0.0
      %1146 = vmatpush1.xpose.msra.mxu0 0.0
      %1147 = vmatprep.subr.mxu0 0.0
      %1148 = vmatpush1.xpose.msra.mxu0 0.0
      %1149 = vmatprep.subr.mxu0 0.0
      %1150 = vmatpush1.xpose.msra.mxu0 0.0
      %1151 = vmatprep.subr.mxu0 0.0
      %1152 = vmatpush1.xpose.msra.mxu0 0.0
      %1153 = vmatprep.subr.mxu0 0.0
      %1154 = vmatpush1.xpose.msra.mxu0 0.0
      %1155 = vmatprep.subr.mxu0 0.0
      %1156 = vmatpush1.xpose.msra.mxu0 0.0
      %1157 = vmatprep.subr.mxu0 0.0
      %1158 = vmatpush1.xpose.msra.mxu0 0.0
      %1159 = vmatprep.subr.mxu0 0.0
      %1160 = vmatpush1.xpose.msra.mxu0 0.0
      %1161 = vmatprep.mubr.f32.mxu0 0.0
      %1162 = vmatmul.mubr.f32.gmra.mrb[0].mxu0 %v1093
      %v1163 = vpop.f32.mrb[0].mxu0
      %v1164 = vadd.f32 0.0, %v1163
      %v1165 = vpop.f32.mrb[0].mxu0
      %1166 = vdwg.mxu0
      %v1167 = vmul.f32 %v1164, 0.35355338
      %v1168 = vsel %vm421, -1e+09, %v1167
      %v1169 = vsel %vm339, %v1168, -inf
      %1170 = vmax.xlane.f32.xlu0 %v1169
      %v1171 = vpop.xlane.xlu0 %1170
      %v1172 = vsub.f32 %v1168, %v1171
      %v1173 = vmul.f32 %v1172, 1.442695
      %v1174 = vpow.pop %v1173
      %v1175 = vsel %vm339, %v1174, 0.0
      %1176 = vadd.xlane.f32.xlu0 %v1175
      %v1177 = vpop.xlane.xlu0 %1176
      %v1178 = vrcp.pop %v1177
      %v1179 = vmul.f32 %v1174, %v1178
      %1180 = vrot.lane.b32.xlu0 %v455, 104
      %v1181 = vpop.permute.xlu0 %1180
      %v1184 = vsel %vm339, %v1179, 0
      %1186 = vmatprep.subr.mxu0 0.0
      %1187 = vmatpush1.msra.mxu0 %v1181
      %1188 = vmatprep.subr.mxu0 0.0
      %1189 = vmatpush1.msra.mxu0 0.0
      %1190 = vmatprep.subr.mxu0 0.0
      %1191 = vmatpush1.msra.mxu0 0.0
      %1192 = vmatprep.subr.mxu0 0.0
      %1193 = vmatpush1.msra.mxu0 0.0
      %1194 = vmatprep.subr.mxu0 0.0
      %1195 = vmatpush1.msra.mxu0 0.0
      %1196 = vmatprep.subr.mxu0 0.0
      %1197 = vmatpush1.msra.mxu0 0.0
      %1198 = vmatprep.subr.mxu0 0.0
      %1199 = vmatpush1.msra.mxu0 0.0
      %1200 = vmatprep.subr.mxu0 0.0
      %1201 = vmatpush1.msra.mxu0 0.0
      %1202 = vmatprep.subr.mxu0 0.0
      %1203 = vmatpush1.msra.mxu0 0.0
      %1204 = vmatprep.subr.mxu0 0.0
      %1205 = vmatpush1.msra.mxu0 0.0
      %1206 = vmatprep.subr.mxu0 0.0
      %1207 = vmatpush1.msra.mxu0 0.0
      %1208 = vmatprep.subr.mxu0 0.0
      %1209 = vmatpush1.msra.mxu0 0.0
      %1210 = vmatprep.subr.mxu0 0.0
      %1211 = vmatpush1.msra.mxu0 0.0
      %1212 = vmatprep.subr.mxu0 0.0
      %1213 = vmatpush1.msra.mxu0 0.0
      %1214 = vmatprep.subr.mxu0 0.0
      %1215 = vmatpush1.msra.mxu0 0.0
      %1216 = vmatprep.subr.mxu0 0.0
      %1217 = vmatpush1.msra.mxu0 0.0
      %1218 = vmatprep.subr.mxu0 0.0
      %1219 = vmatpush1.msra.mxu0 0.0
      %1220 = vmatprep.subr.mxu0 0.0
      %1221 = vmatpush1.msra.mxu0 0.0
      %1222 = vmatprep.subr.mxu0 0.0
      %1223 = vmatpush1.msra.mxu0 0.0
      %1224 = vmatprep.subr.mxu0 0.0
      %1225 = vmatpush1.msra.mxu0 0.0
      %1226 = vmatprep.subr.mxu0 0.0
      %1227 = vmatpush1.msra.mxu0 0.0
      %1228 = vmatprep.subr.mxu0 0.0
      %1229 = vmatpush1.msra.mxu0 0.0
      %1230 = vmatprep.subr.mxu0 0.0
      %1231 = vmatpush1.msra.mxu0 0.0
      %1232 = vmatprep.subr.mxu0 0.0
      %1233 = vmatpush1.msra.mxu0 0.0
      %1234 = vmatprep.subr.mxu0 0.0
      %1235 = vmatpush1.msra.mxu0 0.0
      %1236 = vmatprep.subr.mxu0 0.0
      %1237 = vmatpush1.msra.mxu0 0.0
      %1238 = vmatprep.subr.mxu0 0.0
      %1239 = vmatpush1.msra.mxu0 0.0
      %1240 = vmatprep.subr.mxu0 0.0
      %1241 = vmatpush1.msra.mxu0 0.0
      %1242 = vmatprep.subr.mxu0 0.0
      %1243 = vmatpush1.msra.mxu0 0.0
      %1244 = vmatprep.subr.mxu0 0.0
      %1245 = vmatpush1.msra.mxu0 0.0
      %1246 = vmatprep.subr.mxu0 0.0
      %1247 = vmatpush1.msra.mxu0 0.0
      %1248 = vmatprep.subr.mxu0 0.0
      %1249 = vmatpush1.msra.mxu0 0.0
      %1250 = vmatprep.mubr.f32.mxu0 0.0
      %1251 = vmatmul.mubr.f32.gmra.mrb[0].mxu0 %v1184
      %v1252 = vpop.f32.mrb[0].mxu0
      %v1253 = vadd.f32 0.0, %v1252
      %v1254 = vpop.f32.mrb[0].mxu0
      %1255 = vdwg.mxu0
      %v1256 = vld [vmem:[%s2 + $0x18] sm:$0xff]
      %v1258 = vsel %vm339, %v1253, 0
      %1260 = vmatprep.subr.mxu0 0.0
      %1261 = vmatpush1.msra.mxu0 %v1256
      %1262 = vmatprep.subr.mxu0 0.0
      %1263 = vmatpush1.msra.mxu0 0.0
      %1264 = vmatprep.subr.mxu0 0.0
      %1265 = vmatpush1.msra.mxu0 0.0
      %1266 = vmatprep.subr.mxu0 0.0
      %1267 = vmatpush1.msra.mxu0 0.0
      %1268 = vmatprep.subr.mxu0 0.0
      %1269 = vmatpush1.msra.mxu0 0.0
      %1270 = vmatprep.subr.mxu0 0.0
      %1271 = vmatpush1.msra.mxu0 0.0
      %1272 = vmatprep.subr.mxu0 0.0
      %1273 = vmatpush1.msra.mxu0 0.0
      %1274 = vmatprep.subr.mxu0 0.0
      %1275 = vmatpush1.msra.mxu0 0.0
      %1276 = vmatprep.subr.mxu0 0.0
      %1277 = vmatpush1.msra.mxu0 0.0
      %1278 = vmatprep.subr.mxu0 0.0
      %1279 = vmatpush1.msra.mxu0 0.0
      %1280 = vmatprep.subr.mxu0 0.0
      %1281 = vmatpush1.msra.mxu0 0.0
      %1282 = vmatprep.subr.mxu0 0.0
      %1283 = vmatpush1.msra.mxu0 0.0
      %1284 = vmatprep.subr.mxu0 0.0
      %1285 = vmatpush1.msra.mxu0 0.0
      %1286 = vmatprep.subr.mxu0 0.0
      %1287 = vmatpush1.msra.mxu0 0.0
      %1288 = vmatprep.subr.mxu0 0.0
      %1289 = vmatpush1.msra.mxu0 0.0
      %1290 = vmatprep.subr.mxu0 0.0
      %1291 = vmatpush1.msra.mxu0 0.0
      %1292 = vmatprep.subr.mxu0 0.0
      %1293 = vmatpush1.msra.mxu0 0.0
      %1294 = vmatprep.subr.mxu0 0.0
      %1295 = vmatpush1.msra.mxu0 0.0
      %1296 = vmatprep.subr.mxu0 0.0
      %1297 = vmatpush1.msra.mxu0 0.0
      %1298 = vmatprep.subr.mxu0 0.0
      %1299 = vmatpush1.msra.mxu0 0.0
      %1300 = vmatprep.subr.mxu0 0.0
      %1301 = vmatpush1.msra.mxu0 0.0
      %1302 = vmatprep.subr.mxu0 0.0
      %1303 = vmatpush1.msra.mxu0 0.0
      %1304 = vmatprep.subr.mxu0 0.0
      %1305 = vmatpush1.msra.mxu0 0.0
      %1306 = vmatprep.subr.mxu0 0.0
      %1307 = vmatpush1.msra.mxu0 0.0
      %1308 = vmatprep.subr.mxu0 0.0
      %1309 = vmatpush1.msra.mxu0 0.0
      %1310 = vmatprep.subr.mxu0 0.0
      %1311 = vmatpush1.msra.mxu0 0.0
      %1312 = vmatprep.subr.mxu0 0.0
      %1313 = vmatpush1.msra.mxu0 0.0
      %1314 = vmatprep.subr.mxu0 0.0
      %1315 = vmatpush1.msra.mxu0 0.0
      %1316 = vmatprep.subr.mxu0 0.0
      %1317 = vmatpush1.msra.mxu0 0.0
      %1318 = vmatprep.subr.mxu0 0.0
      %1319 = vmatpush1.msra.mxu0 0.0
      %1320 = vmatprep.subr.mxu0 0.0
      %1321 = vmatpush1.msra.mxu0 0.0
      %1322 = vmatprep.subr.mxu0 0.0
      %1323 = vmatpush1.msra.mxu0 0.0
      %1324 = vmatprep.mubr.f32.mxu0 0.0
      %1325 = vmatmul.mubr.f32.gmra.mrb[0].mxu0 %v1258
      %v1326 = vpop.f32.mrb[0].mxu0
      %v1327 = vadd.f32 0.0, %v1326
      %v1328 = vpop.f32.mrb[0].mxu0
      %1329 = vdwg.mxu0
      %v1330 = vadd.f32 %v1088, %v1327
      %vm1331 = vcmask 261120
      %1332 = vst.msk [vmem:[%s253] sm:$0xff] %vm1331, %v1330
      %p1333 = scmp.lt.s32.totalorder %s16, 1
      %s1334 = scalar_select %p1333, %s16, 1
      %s1335 = smul.addr %s1334, 8
      %s1336 = scalar_lea.vmem %s5, %s1335
      // Predicated region
      $region41: #{encoder_forward.8} parent=39 // pred_check
        %p1337 = pneg %p154
      $region42: #{encoder_forward.8} parent=39 // pred_check_branch
        %1339 = sbr.rel (%p1337) target = $region44
      $region43: #{encoder_forward.8} parent=39 // pred_region
        _
      $region44: #{encoder_forward.8} parent=39 // pred_fallthru
        _
    $region40: #{encoder_forward.8} parent=5 // pred_fallthru
      _
    %p1340 = scmp.le.s32.totalorder 2, %s11
    // Predicated region
    $region45: #{encoder_forward.8} parent=5 // pred_check
      %p1341 = pneg %p1340
    $region46: #{encoder_forward.8} parent=5 // pred_check_branch
      %1343 = sbr.rel (%p1341) target = $region48
    $region47: #{encoder_forward.8} parent=5 // pred_region
      %s1344 = ssub.s32 %s11, 2
      // Predicated region
      $region49: #{encoder_forward.8} parent=47 // pred_check
        %p1345 = pneg %p160
      $region50: #{encoder_forward.8} parent=47 // pred_check_branch
        %1347 = sbr.rel (%p1345) target = $region52
      $region51: #{encoder_forward.8} parent=47 // pred_region
        %p1348 = scmp.lt.s32.totalorder %s17, 1
        %s1349 = scalar_select %p1348, %s17, 1
        %s1350 = smul.addr %s1349, 8
        %s1351 = scalar_lea.vmem %s5, %s1350
      $region52: #{encoder_forward.8} parent=47 // pred_fallthru
        _
    $region48: #{encoder_forward.8} parent=5 // pred_fallthru
      _
  $region6: #{encoder_forward.8} parent=0 // loop_footer
    %s15 = sadd.s32 1, %s11
  $region7: #{encoder_forward.8} parent=0 // loop_footer_branch
    %10 = sbr.rel target = $region3
  $region8: #{encoder_forward.8} parent=0 // loop_exit
    _

</llo_original>
